<compile_context>
chip_gen: v6e
topology: v6e:2x2x1
jax: 0.10.0
libtpu: 0.0.40
codegen_flags: <defaults>
</compile_context>

<pallas_src>
import functools

import jax
import jax.numpy as jnp
from jax.experimental import pallas as pl
from jax.experimental.pallas import tpu as pltpu

_SUBLANE_BF16 = 16   # bf16 packs 2 rows per sublane -> keep batch tiles %16


def _round_up(x, m):
    return (x + m - 1) // m * m


def _mlp_kernel(x_ref, w1_ref, b1_ref, w2_ref, b2_ref, w3_ref, b3_ref, o_ref):
    # x/w refs already arrive in the matmul dtype (cast in the wrapper, once).
    mm_dtype = w1_ref.dtype
    # fc1 + ReLU  (MXU matmul, f32 accumulation; elementwise kept in f32)
    h1 = jnp.dot(x_ref[...], w1_ref[...], preferred_element_type=jnp.float32)
    h1 = jnp.maximum(h1 + b1_ref[...], 0.0)
    # dropout (eval mode -> identity)
    # fc2 + ReLU   (activation cast to mm dtype is unavoidable in-kernel)
    h2 = jnp.dot(h1.astype(mm_dtype), w2_ref[...],
                 preferred_element_type=jnp.float32)
    h2 = jnp.maximum(h2 + b2_ref[...], 0.0)
    # dropout (eval mode -> identity)
    # fc3 (no activation)
    out = jnp.dot(h2.astype(mm_dtype), w3_ref[...],
                  preferred_element_type=jnp.float32)
    o_ref[...] = (out + b3_ref[...]).astype(o_ref.dtype)


def mlp_forward(x, params, *, tile_b=1024, matmul_dtype=jnp.bfloat16):
    """Fused 3-layer MLP forward pass, batch-tiled Pallas kernel.

    x:      [B, D_in]
    params: dict with w1 [D_in,H], b1 [1,H], w2 [H,H], b2 [1,H],
            w3 [H,D_out], b3 [1,D_out]   (weights are [in, out], i.e. the
            transpose of the PyTorch nn.Linear layout)
    """
    B, d_in = x.shape
    h = params["w1"].shape[1]
    d_out = params["w3"].shape[1]
    out_dtype = x.dtype

    # Wrapper-side casts (no per-grid-step VPU repack inside the kernel).
    # For repeated calls, callers can pre-cast the weights once at setup time
    # and these become no-ops.
    x_mm = x.astype(matmul_dtype)
    w1 = params["w1"].astype(matmul_dtype)
    w2 = params["w2"].astype(matmul_dtype)
    w3 = params["w3"].astype(matmul_dtype)
    b1 = params["b1"].astype(jnp.float32)   # bias add / ReLU stay f32
    b2 = params["b2"].astype(jnp.float32)
    b3 = params["b3"].astype(jnp.float32)

    # Batch tile: multiple of 16 (bf16 sublane packing); no HBM batch padding —
    # grid uses cdiv and the partial last block is read-padded / write-masked
    # by the pipeline.
    tile_b = max(_SUBLANE_BF16, min(int(tile_b), _round_up(B, _SUBLANE_BF16)))
    # v7x megacore: keep at least 2 grid steps when the batch allows it so the
    # "parallel" batch axis can be split across the two TensorCores.
    if tile_b >= B and B > _SUBLANE_BF16:
        tile_b = _round_up(pl.cdiv(B, 2), _SUBLANE_BF16)
    tile_b = _round_up(tile_b, _SUBLANE_BF16)
    grid = (pl.cdiv(B, tile_b),)

    # VMEM budget: double-buffered x/out tiles, single-buffered resident
    # weights/biases, f32 h1/h2 temps; cap at ~75% of physical VMEM per core.
    bpe = jnp.dtype(matmul_dtype).itemsize
    obe = jnp.dtype(out_dtype).itemsize
    est = (2 * tile_b * d_in * bpe                       # x double buffers
           + 2 * tile_b * d_out * obe                    # out double buffers
           + (d_in * h + h * h + h * d_out) * bpe        # resident weights
           + (2 * h + d_out) * 4                         # resident biases
           + 2 * tile_b * h * 4)                         # h1/h2 temps
    try:
        vmem_cap = getattr(pltpu.get_tpu_info(), "vmem_capacity_bytes",
                           64 * 1024 * 1024)
    except Exception:  # trace-time query unavailable -> conservative default
        vmem_cap = 64 * 1024 * 1024
    vmem_limit = int(min(int(0.75 * vmem_cap),
                         max(32 * 1024 * 1024, 4 * est)))

    def build(single_buffer_weights):
        def const_spec(shape):
            # Constant index_map -> VMEM-resident across grid steps; request a
            # single buffer (never re-DMA'd) to halve resident weight VMEM.
            if single_buffer_weights:
                return pl.BlockSpec(shape, lambda i: (0, 0),
                                    pipeline_mode=pl.Buffered(1))
            return pl.BlockSpec(shape, lambda i: (0, 0))

        return pl.pallas_call(
            _mlp_kernel,
            out_shape=jax.ShapeDtypeStruct((B, d_out), out_dtype),
            grid_spec=pltpu.PrefetchScalarGridSpec(
                num_scalar_prefetch=0,
                grid=grid,
                in_specs=[
                    # batch-tiled activation (feature dim = full array dim)
                    pl.BlockSpec((tile_b, d_in), lambda i: (i, 0)),
                    const_spec((d_in, h)),
                    const_spec((1, h)),
                    const_spec((h, h)),
                    const_spec((1, h)),
                    const_spec((h, d_out)),
                    const_spec((1, d_out)),
                ],
                out_specs=pl.BlockSpec((tile_b, d_out), lambda i: (i, 0)),
            ),
            compiler_params=pltpu.CompilerParams(
                dimension_semantics=("parallel",),   # megacore: split batch
                vmem_limit_bytes=vmem_limit,
            ),
        )

    try:
        out = build(True)(x_mm, w1, b1, w2, b2, w3, b3)
    except Exception:
        # TODO(synk): drop this fallback once pl.Buffered(1) on constant
        # weight specs is verified on all target jax/libtpu versions.
        out = build(False)(x_mm, w1, b1, w2, b2, w3, b3)
    return out


def init_mlp_params(key, lk_matrix_size, hidden_size, num_invariants):
    """Deterministic PyTorch-style (Kaiming-uniform) Linear initialization."""
    d_in = lk_matrix_size ** 2
    dims = [(d_in, hidden_size), (hidden_size, hidden_size),
            (hidden_size, num_invariants)]
    params = {}
    keys = jax.random.split(key, 2 * len(dims))
    for i, (fan_in, fan_out) in enumerate(dims):
        bound = 1.0 / jnp.sqrt(jnp.float32(fan_in))
        # weight stored as [fan_in, fan_out] (transpose of PyTorch layout)
        w = jax.random.uniform(keys[2 * i], (fan_in, fan_out),
                               jnp.float32, -bound, bound)
        b = jax.random.uniform(keys[2 * i + 1], (1, fan_out),
                               jnp.float32, -bound, bound)
        params[f"w{i + 1}"] = w
        params[f"b{i + 1}"] = b
    return params


def mlp_reference(x, params):
    """Pure-JAX reference for correctness check."""
    h = jnp.maximum(x @ params["w1"] + params["b1"], 0.0)
    h = jnp.maximum(h @ params["w2"] + params["b2"], 0.0)
    return h @ params["w3"] + params["b3"]


if __name__ == "__main__":
    lk_matrix_size = 4      # -> input dim 16
    hidden_size = 32
    num_invariants = 8
    batch = 40              # not a multiple of the tile -> exercises masked tail

    key = jax.random.PRNGKey(0)
    k_params, k_x = jax.random.split(key)
    params = init_mlp_params(k_params, lk_matrix_size, hidden_size,
                             num_invariants)
    x = jax.random.normal(k_x, (batch, lk_matrix_size ** 2), jnp.float32)

    ref = mlp_reference(x, params)

    # Exact f32-operand path; tile_b=16 -> 3 grid steps incl. a partial tail.
    out_f32 = jax.block_until_ready(
        mlp_forward(x, params, tile_b=16, matmul_dtype=jnp.float32))
    assert out_f32.shape == (batch, num_invariants)
    assert jnp.allclose(out_f32, ref, atol=1e-5, rtol=1e-5)

    # Default path: bf16 MXU operands, f32 accumulation (fast on v5e/v6e/v7x);
    # default tile_b clamps to 32 here -> 2 grid steps (megacore-splittable).
    out_bf16 = jax.block_until_ready(mlp_forward(x, params))
    assert out_bf16.shape == (batch, num_invariants)
    assert jnp.allclose(out_bf16, ref, atol=5e-2, rtol=5e-2)

    print("KERNEL_OK")
</pallas_src>

<mosaic_0001>
module attributes {stable_mosaic.version = 11 : i64} {
  func.func @_mlp_kernel(%arg0: i32, %arg1: memref<16x16xf32, #tpu.memory_space<vmem>>, %arg2: memref<16x32xf32, #tpu.memory_space<vmem>>, %arg3: memref<1x32xf32, #tpu.memory_space<vmem>>, %arg4: memref<32x32xf32, #tpu.memory_space<vmem>>, %arg5: memref<1x32xf32, #tpu.memory_space<vmem>>, %arg6: memref<32x8xf32, #tpu.memory_space<vmem>>, %arg7: memref<1x8xf32, #tpu.memory_space<vmem>>, %arg8: memref<16x8xf32, #tpu.memory_space<vmem>>) attributes {dimension_semantics = [#tpu.dimension_semantics<parallel>], iteration_bounds = array<i64: 3>, scalar_prefetch = 0 : i64, scratch_operands = 0 : i64, tpu.core_type = #tpu.core_type<tc>, window_params = [{transform_indices = @transform_0, window_bounds = array<i64: 16, 16>}, {pipeline_mode = #tpu.pipeline_mode<synchronous>, transform_indices = @transform_1, window_bounds = array<i64: 16, 32>}, {pipeline_mode = #tpu.pipeline_mode<synchronous>, transform_indices = @transform_2, window_bounds = array<i64: 1, 32>}, {pipeline_mode = #tpu.pipeline_mode<synchronous>, transform_indices = @transform_3, window_bounds = array<i64: 32, 32>}, {pipeline_mode = #tpu.pipeline_mode<synchronous>, transform_indices = @transform_4, window_bounds = array<i64: 1, 32>}, {pipeline_mode = #tpu.pipeline_mode<synchronous>, transform_indices = @transform_5, window_bounds = array<i64: 32, 8>}, {pipeline_mode = #tpu.pipeline_mode<synchronous>, transform_indices = @transform_6, window_bounds = array<i64: 1, 8>}, {transform_indices = @transform_7, window_bounds = array<i64: 16, 8>}]} {
    %c0 = arith.constant 0 : index
    %c0_0 = arith.constant 0 : index
    %0 = vector.load %arg1[%c0, %c0_0] : memref<16x16xf32, #tpu.memory_space<vmem>>, vector<16x16xf32>
    %c0_1 = arith.constant 0 : index
    %c0_2 = arith.constant 0 : index
    %1 = vector.load %arg2[%c0_1, %c0_2] : memref<16x32xf32, #tpu.memory_space<vmem>>, vector<16x32xf32>
    %cst = arith.constant dense<0.000000e+00> : vector<16x32xf32>
    %2 = tpu.matmul %0, %1, %cst {dimension_numbers = #tpu.dot_dimension_numbers<[1], [0], [0], [1], [0, 0, 1, 1], [], []>} : vector<16x16xf32>, vector<16x32xf32>, vector<16x32xf32> -> vector<16x32xf32>
    %c0_3 = arith.constant 0 : index
    %c0_4 = arith.constant 0 : index
    %3 = vector.load %arg3[%c0_3, %c0_4] : memref<1x32xf32, #tpu.memory_space<vmem>>, vector<1x32xf32>
    %4 = vector.broadcast %3 : vector<1x32xf32> to vector<16x32xf32>
    %5 = arith.addf %2, %4 : vector<16x32xf32>
    %cst_5 = arith.constant 0.000000e+00 : f32
    %6 = vector.broadcast %cst_5 : f32 to vector<16x32xf32>
    %7 = arith.maximumf %5, %6 : vector<16x32xf32>
    %c0_6 = arith.constant 0 : index
    %c0_7 = arith.constant 0 : index
    %8 = vector.load %arg4[%c0_6, %c0_7] : memref<32x32xf32, #tpu.memory_space<vmem>>, vector<32x32xf32>
    %cst_8 = arith.constant dense<0.000000e+00> : vector<16x32xf32>
    %9 = tpu.matmul %7, %8, %cst_8 {dimension_numbers = #tpu.dot_dimension_numbers<[1], [0], [0], [1], [0, 0, 1, 1], [], []>} : vector<16x32xf32>, vector<32x32xf32>, vector<16x32xf32> -> vector<16x32xf32>
    %c0_9 = arith.constant 0 : index
    %c0_10 = arith.constant 0 : index
    %10 = vector.load %arg5[%c0_9, %c0_10] : memref<1x32xf32, #tpu.memory_space<vmem>>, vector<1x32xf32>
    %11 = vector.broadcast %10 : vector<1x32xf32> to vector<16x32xf32>
    %12 = arith.addf %9, %11 : vector<16x32xf32>
    %cst_11 = arith.constant 0.000000e+00 : f32
    %13 = vector.broadcast %cst_11 : f32 to vector<16x32xf32>
    %14 = arith.maximumf %12, %13 : vector<16x32xf32>
    %c0_12 = arith.constant 0 : index
    %c0_13 = arith.constant 0 : index
    %15 = vector.load %arg6[%c0_12, %c0_13] : memref<32x8xf32, #tpu.memory_space<vmem>>, vector<32x8xf32>
    %cst_14 = arith.constant dense<0.000000e+00> : vector<16x8xf32>
    %16 = tpu.matmul %14, %15, %cst_14 {dimension_numbers = #tpu.dot_dimension_numbers<[1], [0], [0], [1], [0, 0, 1, 1], [], []>} : vector<16x32xf32>, vector<32x8xf32>, vector<16x8xf32> -> vector<16x8xf32>
    %c0_15 = arith.constant 0 : index
    %c0_16 = arith.constant 0 : index
    %17 = vector.load %arg7[%c0_15, %c0_16] : memref<1x8xf32, #tpu.memory_space<vmem>>, vector<1x8xf32>
    %18 = vector.broadcast %17 : vector<1x8xf32> to vector<16x8xf32>
    %19 = arith.addf %16, %18 : vector<16x8xf32>
    %c0_17 = arith.constant 0 : index
    %c0_18 = arith.constant 0 : index
    %20 = vector.load %arg8[%c0_17, %c0_18] : memref<16x8xf32, #tpu.memory_space<vmem>>, vector<16x8xf32>
    tpu.vector_store %arg8[%c0_17, %c0_18], %19 {strides = array<i32>} : memref<16x8xf32, #tpu.memory_space<vmem>>, vector<16x8xf32>,
    return
  }
  func.func @transform_0(%arg0: i32) -> (i32, i32) {
    %c0_i32 = arith.constant 0 : i32
    %c0_i32_0 = arith.constant 0 : i32
    return %arg0, %c0_i32 : i32, i32
  }
  func.func @transform_1(%arg0: i32) -> (i32, i32) {
    %c0_i32 = arith.constant 0 : i32
    %c0_i32_0 = arith.constant 0 : i32
    %c0_i32_1 = arith.constant 0 : i32
    return %c0_i32, %c0_i32_0 : i32, i32
  }
  func.func @transform_2(%arg0: i32) -> (i32, i32) {
    %c0_i32 = arith.constant 0 : i32
    %c0_i32_0 = arith.constant 0 : i32
    %c0_i32_1 = arith.constant 0 : i32
    return %c0_i32, %c0_i32_0 : i32, i32
  }
  func.func @transform_3(%arg0: i32) -> (i32, i32) {
    %c0_i32 = arith.constant 0 : i32
    %c0_i32_0 = arith.constant 0 : i32
    %c0_i32_1 = arith.constant 0 : i32
    return %c0_i32, %c0_i32_0 : i32, i32
  }
  func.func @transform_4(%arg0: i32) -> (i32, i32) {
    %c0_i32 = arith.constant 0 : i32
    %c0_i32_0 = arith.constant 0 : i32
    %c0_i32_1 = arith.constant 0 : i32
    return %c0_i32, %c0_i32_0 : i32, i32
  }
  func.func @transform_5(%arg0: i32) -> (i32, i32) {
    %c0_i32 = arith.constant 0 : i32
    %c0_i32_0 = arith.constant 0 : i32
    %c0_i32_1 = arith.constant 0 : i32
    return %c0_i32, %c0_i32_0 : i32, i32
  }
  func.func @transform_6(%arg0: i32) -> (i32, i32) {
    %c0_i32 = arith.constant 0 : i32
    %c0_i32_0 = arith.constant 0 : i32
    %c0_i32_1 = arith.constant 0 : i32
    return %c0_i32, %c0_i32_0 : i32, i32
  }
  func.func @transform_7(%arg0: i32) -> (i32, i32) {
    %c0_i32 = arith.constant 0 : i32
    %c0_i32_0 = arith.constant 0 : i32
    return %arg0, %c0_i32 : i32, i32
  }
}

module attributes {stable_mosaic.version = 11 : i64} {
  func.func @_mlp_kernel(%arg0: i32, %arg1: memref<16x16xf32, #tpu.memory_space<vmem>>, %arg2: memref<16x32xf32, #tpu.memory_space<vmem>>, %arg3: memref<1x32xf32, #tpu.memory_space<vmem>>, %arg4: memref<32x32xf32, #tpu.memory_space<vmem>>, %arg5: memref<1x32xf32, #tpu.memory_space<vmem>>, %arg6: memref<32x8xf32, #tpu.memory_space<vmem>>, %arg7: memref<1x8xf32, #tpu.memory_space<vmem>>, %arg8: memref<16x8xf32, #tpu.memory_space<vmem>>) attributes {dimension_semantics = [#tpu.dimension_semantics<parallel>], iteration_bounds = array<i64: 3>, scalar_prefetch = 0 : i64, scratch_operands = 0 : i64, tpu.core_type = #tpu.core_type<tc>, window_params = [{transform_indices = @transform_0, window_bounds = array<i64: 16, 16>}, {pipeline_mode = #tpu.pipeline_mode<synchronous>, transform_indices = @transform_1, window_bounds = array<i64: 16, 32>}, {pipeline_mode = #tpu.pipeline_mode<synchronous>, transform_indices = @transform_2, window_bounds = array<i64: 1, 32>}, {pipeline_mode = #tpu.pipeline_mode<synchronous>, transform_indices = @transform_3, window_bounds = array<i64: 32, 32>}, {pipeline_mode = #tpu.pipeline_mode<synchronous>, transform_indices = @transform_4, window_bounds = array<i64: 1, 32>}, {pipeline_mode = #tpu.pipeline_mode<synchronous>, transform_indices = @transform_5, window_bounds = array<i64: 32, 8>}, {pipeline_mode = #tpu.pipeline_mode<synchronous>, transform_indices = @transform_6, window_bounds = array<i64: 1, 8>}, {transform_indices = @transform_7, window_bounds = array<i64: 16, 8>}]} {
    %c0 = arith.constant 0 : index
    %c0_0 = arith.constant 0 : index
    %0 = vector.load %arg1[%c0, %c0_0] : memref<16x16xf32, #tpu.memory_space<vmem>>, vector<16x16xf32>
    %c0_1 = arith.constant 0 : index
    %c0_2 = arith.constant 0 : index
    %1 = vector.load %arg2[%c0_1, %c0_2] : memref<16x32xf32, #tpu.memory_space<vmem>>, vector<16x32xf32>
    %cst = arith.constant dense<0.000000e+00> : vector<16x32xf32>
    %2 = tpu.matmul %0, %1, %cst {dimension_numbers = #tpu.dot_dimension_numbers<[1], [0], [0], [1], [0, 0, 1, 1], [], []>} : vector<16x16xf32>, vector<16x32xf32>, vector<16x32xf32> -> vector<16x32xf32>
    %c0_3 = arith.constant 0 : index
    %c0_4 = arith.constant 0 : index
    %3 = vector.load %arg3[%c0_3, %c0_4] : memref<1x32xf32, #tpu.memory_space<vmem>>, vector<1x32xf32>
    %4 = vector.broadcast %3 : vector<1x32xf32> to vector<16x32xf32>
    %5 = arith.addf %2, %4 : vector<16x32xf32>
    %cst_5 = arith.constant 0.000000e+00 : f32
    %6 = vector.broadcast %cst_5 : f32 to vector<16x32xf32>
    %7 = arith.maximumf %5, %6 : vector<16x32xf32>
    %c0_6 = arith.constant 0 : index
    %c0_7 = arith.constant 0 : index
    %8 = vector.load %arg4[%c0_6, %c0_7] : memref<32x32xf32, #tpu.memory_space<vmem>>, vector<32x32xf32>
    %cst_8 = arith.constant dense<0.000000e+00> : vector<16x32xf32>
    %9 = tpu.matmul %7, %8, %cst_8 {dimension_numbers = #tpu.dot_dimension_numbers<[1], [0], [0], [1], [0, 0, 1, 1], [], []>} : vector<16x32xf32>, vector<32x32xf32>, vector<16x32xf32> -> vector<16x32xf32>
    %c0_9 = arith.constant 0 : index
    %c0_10 = arith.constant 0 : index
    %10 = vector.load %arg5[%c0_9, %c0_10] : memref<1x32xf32, #tpu.memory_space<vmem>>, vector<1x32xf32>
    %11 = vector.broadcast %10 : vector<1x32xf32> to vector<16x32xf32>
    %12 = arith.addf %9, %11 : vector<16x32xf32>
    %cst_11 = arith.constant 0.000000e+00 : f32
    %13 = vector.broadcast %cst_11 : f32 to vector<16x32xf32>
    %14 = arith.maximumf %12, %13 : vector<16x32xf32>
    %c0_12 = arith.constant 0 : index
    %c0_13 = arith.constant 0 : index
    %15 = vector.load %arg6[%c0_12, %c0_13] : memref<32x8xf32, #tpu.memory_space<vmem>>, vector<32x8xf32>
    %cst_14 = arith.constant dense<0.000000e+00> : vector<16x8xf32>
    %16 = tpu.matmul %14, %15, %cst_14 {dimension_numbers = #tpu.dot_dimension_numbers<[1], [0], [0], [1], [0, 0, 1, 1], [], []>} : vector<16x32xf32>, vector<32x8xf32>, vector<16x8xf32> -> vector<16x8xf32>
    %c0_15 = arith.constant 0 : index
    %c0_16 = arith.constant 0 : index
    %17 = vector.load %arg7[%c0_15, %c0_16] : memref<1x8xf32, #tpu.memory_space<vmem>>, vector<1x8xf32>
    %18 = vector.broadcast %17 : vector<1x8xf32> to vector<16x8xf32>
    %19 = arith.addf %16, %18 : vector<16x8xf32>
    %c0_17 = arith.constant 0 : index
    %c0_18 = arith.constant 0 : index
    %20 = vector.load %arg8[%c0_17, %c0_18] : memref<16x8xf32, #tpu.memory_space<vmem>>, vector<16x8xf32>
    tpu.vector_store %arg8[%c0_17, %c0_18], %19 {strides = array<i32>} : memref<16x8xf32, #tpu.memory_space<vmem>>, vector<16x8xf32>,
    return
  }
  func.func @transform_0(%arg0: i32) -> (i32, i32) {
    %c0_i32 = arith.constant 0 : i32
    %c0_i32_0 = arith.constant 0 : i32
    return %arg0, %c0_i32 : i32, i32
  }
  func.func @transform_1(%arg0: i32) -> (i32, i32) {
    %c0_i32 = arith.constant 0 : i32
    %c0_i32_0 = arith.constant 0 : i32
    %c0_i32_1 = arith.constant 0 : i32
    return %c0_i32, %c0_i32_0 : i32, i32
  }
  func.func @transform_2(%arg0: i32) -> (i32, i32) {
    %c0_i32 = arith.constant 0 : i32
    %c0_i32_0 = arith.constant 0 : i32
    %c0_i32_1 = arith.constant 0 : i32
    return %c0_i32, %c0_i32_0 : i32, i32
  }
  func.func @transform_3(%arg0: i32) -> (i32, i32) {
    %c0_i32 = arith.constant 0 : i32
    %c0_i32_0 = arith.constant 0 : i32
    %c0_i32_1 = arith.constant 0 : i32
    return %c0_i32, %c0_i32_0 : i32, i32
  }
  func.func @transform_4(%arg0: i32) -> (i32, i32) {
    %c0_i32 = arith.constant 0 : i32
    %c0_i32_0 = arith.constant 0 : i32
    %c0_i32_1 = arith.constant 0 : i32
    return %c0_i32, %c0_i32_0 : i32, i32
  }
  func.func @transform_5(%arg0: i32) -> (i32, i32) {
    %c0_i32 = arith.constant 0 : i32
    %c0_i32_0 = arith.constant 0 : i32
    %c0_i32_1 = arith.constant 0 : i32
    return %c0_i32, %c0_i32_0 : i32, i32
  }
  func.func @transform_6(%arg0: i32) -> (i32, i32) {
    %c0_i32 = arith.constant 0 : i32
    %c0_i32_0 = arith.constant 0 : i32
    %c0_i32_1 = arith.constant 0 : i32
    return %c0_i32, %c0_i32_0 : i32, i32
  }
  func.func @transform_7(%arg0: i32) -> (i32, i32) {
    %c0_i32 = arith.constant 0 : i32
    %c0_i32_0 = arith.constant 0 : i32
    return %arg0, %c0_i32 : i32, i32
  }
}

</mosaic_0001>

<llo_original>
// kernel: tpu_custom_call.1
$region0: #{tpu_custom_call.1}
  #allocation0 [shape = 'u32[]', space=smem, size = 0x4, offset = 0x4, fixed_abs, tag = 'smem constant byte address 0x4 - core index']
  #allocation1 [shape = 'u32[144,128]{1,0:T(1,128)}', space=vmem, size = 0x12000, scoped, tag = 'internal scratch']
  %s0 = inlined_call_operand.vmem [shape: f32[40,16], index: 0, kind: input, shape index: {}]
  %s1 = inlined_call_operand.vmem [shape: f32[16,32], index: 1, kind: input, shape index: {}]
  %s2 = inlined_call_operand.vmem [shape: f32[1,32], index: 2, kind: input, shape index: {}]
  %s3 = inlined_call_operand.vmem [shape: f32[32,32], index: 3, kind: input, shape index: {}]
  %s4 = inlined_call_operand.vmem [shape: f32[1,32], index: 4, kind: input, shape index: {}]
  %s5 = inlined_call_operand.vmem [shape: f32[32,8], index: 5, kind: input, shape index: {}]
  %s6 = inlined_call_operand.vmem [shape: f32[1,8], index: 6, kind: input, shape index: {}]
  %s7 = inlined_call_operand.vmem [shape: f32[40,8], index: 7, kind: output, shape index: {}]
  %s8 = sld [smem:[#allocation0]]
  $region109: #{tpu_custom_call.1} parent=0
    _
  %s10 = ssub.s32 1, %s8
  %s11 = scalar_select 0, %s10, %s8
  $region1: #{tpu_custom_call.1} parent=0
    #allocation2 [shape = 'u8[16384]{0}', space=vmem, size = 0x4000, scoped, tag = 'output window, operand 0']
    loop: start=0, step=1, limit=5
    $region2: #{tpu_custom_call.1} parent=1 // loop_pre_header
      _
    $region3: #{tpu_custom_call.1} parent=1 // loop_header
      %s13 = sphi 0, %s17
      %p14 = scmp.ge.s32.totalorder %s13, 5
      %s23 = sphi 0, %s25
      %s26 = sphi 0, %s23
      %s27 = sphi 0, %s26
      %s43 = sphi 0, %s27
      %s47 = sphi 0, %s47
      %s49 = sphi 0, %s47
      %s50 = sphi 0, %s49
      %s64 = sphi 0, %s50
      %s68 = sphi 0, %s68
      %s70 = sphi 0, %s68
      %s71 = sphi 0, %s70
      %s85 = sphi 0, %s71
      %s89 = sphi 0, %s89
      %s91 = sphi 0, %s89
      %s92 = sphi 0, %s91
      %s106 = sphi 0, %s92
      %s110 = sphi 0, %s110
      %s112 = sphi 0, %s110
      %s113 = sphi 0, %s112
      %s127 = sphi 0, %s113
      %s131 = sphi 0, %s131
      %s133 = sphi 0, %s131
      %s134 = sphi 0, %s133
      %s148 = sphi 0, %s134
      %s152 = sphi 0, %s152
      %s154 = sphi 0, %s152
      %s155 = sphi 0, %s154
      %s169 = sphi 0, %s155
      %s175 = sphi 0, %s177
      %s178 = sphi 0, %s175
      %s179 = sphi 0, %s178
      %s195 = sphi 0, %s179
    $region4: #{tpu_custom_call.1} parent=1 // loop_header_branch
      %16 = sbr.rel (%p14) target = $region8
    $region5: #{tpu_custom_call.1} parent=1 // loop_body
      %s18 = ssub.s32 %s13, 1
      %s19 = ssub.s32 %s13, 2
      %s20 = sadd.s32 %s13, 1
      %s21 = ssub.s32 %s13, %s20
      %p22 = scmp.eq.s32.totalorder %s21, 0
      %s24 = sadd.s32 %s23, 1
      %s25 = scalar_select %p22, %s23, %s24
      %p28 = pneg %p22
      %p29 = scmp.eq.s32.totalorder %s13, 2
      %p30 = por %p28, %p29
      %p31 = scmp.ne.s32.totalorder %s23, %s26
      %p32 = scmp.eq.s32.totalorder %s13, 0
      %p33 = por %p31, %p32
      %p34 = scmp.ne.s32.totalorder %s23, %s26
      %p35 = scmp.eq.s32.totalorder %s18, 2
      %p36 = por %p34, %p35
      %p37 = scmp.ne.s32.totalorder %s26, %s27
      %p38 = scmp.eq.s32.totalorder %s18, 0
      %p39 = por %p37, %p38
      %p40 = scmp.ne.s32.totalorder %s26, %s27
      %p41 = scmp.eq.s32.totalorder %s19, 2
      %p42 = por %p40, %p41
      %p44 = scmp.ne.s32.totalorder %s27, %s43
      %p45 = scmp.eq.s32.totalorder %s19, 0
      %p46 = por %p44, %p45
      %s48 = sadd.s32 %s47, 1
      %p51 = scmp.eq.s32.totalorder %s13, 2
      %p52 = scmp.ne.s32.totalorder %s47, %s49
      %p53 = scmp.eq.s32.totalorder %s13, 0
      %p54 = por %p52, %p53
      %p55 = scmp.ne.s32.totalorder %s47, %s49
      %p56 = scmp.eq.s32.totalorder %s18, 2
      %p57 = por %p55, %p56
      %p58 = scmp.ne.s32.totalorder %s49, %s50
      %p59 = scmp.eq.s32.totalorder %s18, 0
      %p60 = por %p58, %p59
      %p61 = scmp.ne.s32.totalorder %s49, %s50
      %p62 = scmp.eq.s32.totalorder %s19, 2
      %p63 = por %p61, %p62
      %p65 = scmp.ne.s32.totalorder %s50, %s64
      %p66 = scmp.eq.s32.totalorder %s19, 0
      %p67 = por %p65, %p66
      %s69 = sadd.s32 %s68, 1
      %p72 = scmp.eq.s32.totalorder %s13, 2
      %p73 = scmp.ne.s32.totalorder %s68, %s70
      %p74 = scmp.eq.s32.totalorder %s13, 0
      %p75 = por %p73, %p74
      %p76 = scmp.ne.s32.totalorder %s68, %s70
      %p77 = scmp.eq.s32.totalorder %s18, 2
      %p78 = por %p76, %p77
      %p79 = scmp.ne.s32.totalorder %s70, %s71
      %p80 = scmp.eq.s32.totalorder %s18, 0
      %p81 = por %p79, %p80
      %p82 = scmp.ne.s32.totalorder %s70, %s71
      %p83 = scmp.eq.s32.totalorder %s19, 2
      %p84 = por %p82, %p83
      %p86 = scmp.ne.s32.totalorder %s71, %s85
      %p87 = scmp.eq.s32.totalorder %s19, 0
      %p88 = por %p86, %p87
      %s90 = sadd.s32 %s89, 1
      %p93 = scmp.eq.s32.totalorder %s13, 2
      %p94 = scmp.ne.s32.totalorder %s89, %s91
      %p95 = scmp.eq.s32.totalorder %s13, 0
      %p96 = por %p94, %p95
      %p97 = scmp.ne.s32.totalorder %s89, %s91
      %p98 = scmp.eq.s32.totalorder %s18, 2
      %p99 = por %p97, %p98
      %p100 = scmp.ne.s32.totalorder %s91, %s92
      %p101 = scmp.eq.s32.totalorder %s18, 0
      %p102 = por %p100, %p101
      %p103 = scmp.ne.s32.totalorder %s91, %s92
      %p104 = scmp.eq.s32.totalorder %s19, 2
      %p105 = por %p103, %p104
      %p107 = scmp.ne.s32.totalorder %s92, %s106
      %p108 = scmp.eq.s32.totalorder %s19, 0
      %p109 = por %p107, %p108
      %s111 = sadd.s32 %s110, 1
      %p114 = scmp.eq.s32.totalorder %s13, 2
      %p115 = scmp.ne.s32.totalorder %s110, %s112
      %p116 = scmp.eq.s32.totalorder %s13, 0
      %p117 = por %p115, %p116
      %p118 = scmp.ne.s32.totalorder %s110, %s112
      %p119 = scmp.eq.s32.totalorder %s18, 2
      %p120 = por %p118, %p119
      %p121 = scmp.ne.s32.totalorder %s112, %s113
      %p122 = scmp.eq.s32.totalorder %s18, 0
      %p123 = por %p121, %p122
      %p124 = scmp.ne.s32.totalorder %s112, %s113
      %p125 = scmp.eq.s32.totalorder %s19, 2
      %p126 = por %p124, %p125
      %p128 = scmp.ne.s32.totalorder %s113, %s127
      %p129 = scmp.eq.s32.totalorder %s19, 0
      %p130 = por %p128, %p129
      %s132 = sadd.s32 %s131, 1
      %p135 = scmp.eq.s32.totalorder %s13, 2
      %p136 = scmp.ne.s32.totalorder %s131, %s133
      %p137 = scmp.eq.s32.totalorder %s13, 0
      %p138 = por %p136, %p137
      %p139 = scmp.ne.s32.totalorder %s131, %s133
      %p140 = scmp.eq.s32.totalorder %s18, 2
      %p141 = por %p139, %p140
      %p142 = scmp.ne.s32.totalorder %s133, %s134
      %p143 = scmp.eq.s32.totalorder %s18, 0
      %p144 = por %p142, %p143
      %p145 = scmp.ne.s32.totalorder %s133, %s134
      %p146 = scmp.eq.s32.totalorder %s19, 2
      %p147 = por %p145, %p146
      %p149 = scmp.ne.s32.totalorder %s134, %s148
      %p150 = scmp.eq.s32.totalorder %s19, 0
      %p151 = por %p149, %p150
      %s153 = sadd.s32 %s152, 1
      %p156 = scmp.eq.s32.totalorder %s13, 2
      %p157 = scmp.ne.s32.totalorder %s152, %s154
      %p158 = scmp.eq.s32.totalorder %s13, 0
      %p159 = por %p157, %p158
      %p160 = scmp.ne.s32.totalorder %s152, %s154
      %p161 = scmp.eq.s32.totalorder %s18, 2
      %p162 = por %p160, %p161
      %p163 = scmp.ne.s32.totalorder %s154, %s155
      %p164 = scmp.eq.s32.totalorder %s18, 0
      %p165 = por %p163, %p164
      %p166 = scmp.ne.s32.totalorder %s154, %s155
      %p167 = scmp.eq.s32.totalorder %s19, 2
      %p168 = por %p166, %p167
      %p170 = scmp.ne.s32.totalorder %s155, %s169
      %p171 = scmp.eq.s32.totalorder %s19, 0
      %p172 = por %p170, %p171
      %s173 = ssub.s32 %s13, %s20
      %p174 = scmp.eq.s32.totalorder %s173, 0
      %s176 = sadd.s32 %s175, 1
      %s177 = scalar_select %p174, %s175, %s176
      %p180 = pneg %p174
      %p181 = scmp.eq.s32.totalorder %s13, 2
      %p182 = por %p180, %p181
      %p183 = scmp.ne.s32.totalorder %s175, %s178
      %p184 = scmp.eq.s32.totalorder %s13, 0
      %p185 = por %p183, %p184
      %p186 = scmp.ne.s32.totalorder %s175, %s178
      %p187 = scmp.eq.s32.totalorder %s18, 2
      %p188 = por %p186, %p187
      %p189 = scmp.ne.s32.totalorder %s178, %s179
      %p190 = scmp.eq.s32.totalorder %s18, 0
      %p191 = por %p189, %p190
      %p192 = scmp.ne.s32.totalorder %s178, %s179
      %p193 = scmp.eq.s32.totalorder %s19, 2
      %p194 = por %p192, %p193
      %p196 = scmp.ne.s32.totalorder %s179, %s195
      %p197 = scmp.eq.s32.totalorder %s19, 0
      %p198 = por %p196, %p197
      %p199 = scmp.le.s32.totalorder 1, %s13
      %p200 = scmp.lt.s32.totalorder %s13, 4
      %p201 = pnand %p199, %p200
      %p202 = pneg %p201
      // Predicated region
      $region9: #{tpu_custom_call.1} parent=5 // pred_check
        _
      $region10: #{tpu_custom_call.1} parent=5 // pred_check_branch
        %204 = sbr.rel (%p201) target = $region12
      $region11: #{tpu_custom_call.1} parent=5 // pred_region
        %s205 = ssub.s32 %s13, 1
        // Predicated region
        $region13: #{tpu_custom_call.1} parent=11 // pred_check
          %p206 = pneg %p60
        $region14: #{tpu_custom_call.1} parent=11 // pred_check_branch
          %208 = sbr.rel (%p206) target = $region16
        $region15: #{tpu_custom_call.1} parent=11 // pred_region
          _
        $region16: #{tpu_custom_call.1} parent=11 // pred_fallthru
          _
        // Predicated region
        $region17: #{tpu_custom_call.1} parent=11 // pred_check
          %p209 = pneg %p81
        $region18: #{tpu_custom_call.1} parent=11 // pred_check_branch
          %211 = sbr.rel (%p209) target = $region20
        $region19: #{tpu_custom_call.1} parent=11 // pred_region
          _
        $region20: #{tpu_custom_call.1} parent=11 // pred_fallthru
          _
        // Predicated region
        $region21: #{tpu_custom_call.1} parent=11 // pred_check
          %p212 = pneg %p102
        $region22: #{tpu_custom_call.1} parent=11 // pred_check_branch
          %214 = sbr.rel (%p212) target = $region24
        $region23: #{tpu_custom_call.1} parent=11 // pred_region
          _
        $region24: #{tpu_custom_call.1} parent=11 // pred_fallthru
          _
        // Predicated region
        $region25: #{tpu_custom_call.1} parent=11 // pred_check
          %p215 = pneg %p123
        $region26: #{tpu_custom_call.1} parent=11 // pred_check_branch
          %217 = sbr.rel (%p215) target = $region28
        $region27: #{tpu_custom_call.1} parent=11 // pred_region
          _
        $region28: #{tpu_custom_call.1} parent=11 // pred_fallthru
          _
        // Predicated region
        $region29: #{tpu_custom_call.1} parent=11 // pred_check
          %p218 = pneg %p144
        $region30: #{tpu_custom_call.1} parent=11 // pred_check_branch
          %220 = sbr.rel (%p218) target = $region32
        $region31: #{tpu_custom_call.1} parent=11 // pred_region
          _
        $region32: #{tpu_custom_call.1} parent=11 // pred_fallthru
          _
        // Predicated region
        $region33: #{tpu_custom_call.1} parent=11 // pred_check
          %p221 = pneg %p165
        $region34: #{tpu_custom_call.1} parent=11 // pred_check_branch
          %223 = sbr.rel (%p221) target = $region36
        $region35: #{tpu_custom_call.1} parent=11 // pred_region
          _
        $region36: #{tpu_custom_call.1} parent=11 // pred_fallthru
          _
      $region12: #{tpu_custom_call.1} parent=5 // pred_fallthru
        _
      %p224 = scmp.lt.s32.totalorder %s13, 3
      // Predicated region
      $region37: #{tpu_custom_call.1} parent=5 // pred_check
        %p225 = pneg %p224
      $region38: #{tpu_custom_call.1} parent=5 // pred_check_branch
        %227 = sbr.rel (%p225) target = $region40
      $region39: #{tpu_custom_call.1} parent=5 // pred_region
        // Predicated region
        $region41: #{tpu_custom_call.1} parent=39 // pred_check
          %p228 = pneg %p33
        $region42: #{tpu_custom_call.1} parent=39 // pred_check_branch
          %230 = sbr.rel (%p228) target = $region44
        $region43: #{tpu_custom_call.1} parent=39 // pred_region
          %s231 = smul.u32 2, %s13
          %s232 = ssub.s32 5, %s231
          %p233 = scmp.lt.s32.totalorder %s232, 2
          %s234 = scalar_select %p233, %s232, 2
          %s235 = smul.u32 128, %s234
          %p236 = scmp.lt.s32.totalorder %s231, 4
          %s237 = scalar_select %p236, %s231, 4
          %s238 = smul.addr %s237, 8
          %s239 = scalar_lea.vmem %s0, %s238
          %s240 = smul.u32 2, %s13
          %s241 = ssub.s32 5, %s240
          %p242 = scmp.lt.s32.totalorder %s241, 2
          %s243 = scalar_select %p242, %s241, 2
          %s244 = smul.u32 128, %s243
        $region44: #{tpu_custom_call.1} parent=39 // pred_fallthru
          _
      $region40: #{tpu_custom_call.1} parent=5 // pred_fallthru
        _
      %p245 = scmp.le.s32.totalorder 1, %s13
      %p246 = scmp.lt.s32.totalorder %s13, 4
      %p247 = pnand %p245, %p246
      %p248 = pneg %p247
      // Predicated region
      $region45: #{tpu_custom_call.1} parent=5 // pred_check
        _
      $region46: #{tpu_custom_call.1} parent=5 // pred_check_branch
        %250 = sbr.rel (%p247) target = $region48
      $region47: #{tpu_custom_call.1} parent=5 // pred_region
        %s251 = ssub.s32 %s13, 1
        %s252 = smul.u32 2, %s18
        %s253 = ssub.s32 5, %s252
        %p254 = scmp.lt.s32.totalorder %s253, 2
        %s255 = scalar_select %p254, %s253, 2
        %s256 = smul.u32 128, %s255
        %p257 = scmp.lt.s32.totalorder %s252, 4
        %s258 = scalar_select %p257, %s252, 4
        %s259 = smul.addr %s258, 8
        %s260 = scalar_lea.vmem %s0, %s259
        %p261 = pneg %p39
        %p262 = pneg %p36
        %p263 = pneg %p60
        %p264 = pneg %p57
        %p265 = pneg %p81
        %p266 = pneg %p78
        %p267 = pneg %p102
        %p268 = pneg %p99
        %p269 = pneg %p123
        %p270 = pneg %p120
        %p271 = pneg %p144
        %p272 = pneg %p141
        %p273 = pneg %p165
        %p274 = pneg %p162
        %p275 = pneg %p191
        %p276 = pneg %p188
        %s277 = sand.u32 %s178, 1
        %s278 = sand.u32 %s178, 1
        %s279 = smul.addr %s278, 16
        %s280 = scalar_lea.vmem [#allocation2], %s279
        %s281 = smul.u32 2, %s18
        %s282 = ssub.s32 5, %s281
        %p283 = scmp.lt.s32.totalorder %s282, 2
        %s284 = scalar_select %p283, %s282, 2
        %s285 = smul.u32 128, %s284
        %p286 = scmp.lt.s32.totalorder %s281, 4
        %s287 = scalar_select %p286, %s281, 4
        %s288 = smul.addr %s287, 8
        %s289 = scalar_lea.vmem %s0, %s288
        %s290 = smul.u32 2, %s18
        %s291 = ssub.s32 5, %s290
        %p292 = scmp.lt.s32.totalorder %s291, 2
        %s293 = scalar_select %p292, %s291, 2
        %s294 = smul.u32 128, %s293
        %s295 = smul.u32 2, %s18
        %s296 = ssub.s32 5, %s295
        %p297 = scmp.lt.s32.totalorder %s296, 2
        %s298 = scalar_select %p297, %s296, 2
        %s299 = smul.u32 128, %s298
        %v300 = vld [vmem:[%s289] sm:$0xff]
        %v301 = vld [vmem:[%s289 + $0x8] sm:$0xff]
        %v302 = vld [vmem:[%s1] sm:$0xff]
        %v303 = vld [vmem:[%s1 + $0x8] sm:$0xff]
        %v304 = vld [vmem:[%s2] sm:$0x1]
        %v306 = vlaneseq
        %v307 = vshrl.u32 %v306, 7
        %v308 = vsub.s32 0, %v307
        %v309 = vrot.slane %v304, %v308
        %vm311 = vcmask 130048
        %v313 = vsel %vm311, %v300, 0
        %v316 = vsel %vm311, %v301, 0
        %318 = vmatprep.subr.mxu0 0.0
        %319 = vmatpush1.msra.mxu0 0.0
        %320 = vmatprep.subr.mxu0 0.0
        %321 = vmatpush1.msra.mxu0 0.0
        %322 = vmatprep.subr.mxu0 0.0
        %323 = vmatpush1.msra.mxu0 0.0
        %324 = vmatprep.subr.mxu0 0.0
        %325 = vmatpush1.msra.mxu0 0.0
        %326 = vmatprep.subr.mxu0 0.0
        %327 = vmatpush1.msra.mxu0 0.0
        %328 = vmatprep.subr.mxu0 0.0
        %329 = vmatpush1.msra.mxu0 0.0
        %330 = vmatprep.subr.mxu0 0.0
        %331 = vmatpush1.msra.mxu0 0.0
        %332 = vmatprep.subr.mxu0 0.0
        %333 = vmatpush1.msra.mxu0 0.0
        %334 = vmatprep.subr.mxu0 0.0
        %335 = vmatpush1.msra.mxu0 0.0
        %336 = vmatprep.subr.mxu0 0.0
        %337 = vmatpush1.msra.mxu0 0.0
        %338 = vmatprep.subr.mxu0 0.0
        %339 = vmatpush1.msra.mxu0 0.0
        %340 = vmatprep.subr.mxu0 0.0
        %341 = vmatpush1.msra.mxu0 0.0
        %342 = vmatprep.subr.mxu0 0.0
        %343 = vmatpush1.msra.mxu0 0.0
        %344 = vmatprep.subr.mxu0 0.0
        %345 = vmatpush1.msra.mxu0 0.0
        %346 = vmatprep.subr.mxu0 0.0
        %347 = vmatpush1.msra.mxu0 %v303
        %348 = vmatprep.subr.mxu0 0.0
        %349 = vmatpush1.msra.mxu0 %v302
        %350 = vmatprep.subr.mxu0 0.0
        %351 = vmatpush2.msra.mxu0 0.0
        %352 = vmatprep.subr.mxu0 0.0
        %353 = vmatpush2.msra.mxu0 0.0
        %354 = vmatprep.subr.mxu0 0.0
        %355 = vmatpush2.msra.mxu0 0.0
        %356 = vmatprep.subr.mxu0 0.0
        %357 = vmatpush2.msra.mxu0 0.0
        %358 = vmatprep.subr.mxu0 0.0
        %359 = vmatpush2.msra.mxu0 0.0
        %360 = vmatprep.subr.mxu0 0.0
        %361 = vmatpush2.msra.mxu0 0.0
        %362 = vmatprep.subr.mxu0 0.0
        %363 = vmatpush2.msra.mxu0 0.0
        %364 = vmatprep.subr.mxu0 0.0
        %365 = vmatpush2.msra.mxu0 0.0
        %366 = vmatprep.subr.mxu0 0.0
        %367 = vmatpush2.msra.mxu0 0.0
        %368 = vmatprep.subr.mxu0 0.0
        %369 = vmatpush2.msra.mxu0 0.0
        %370 = vmatprep.subr.mxu0 0.0
        %371 = vmatpush2.msra.mxu0 0.0
        %372 = vmatprep.subr.mxu0 0.0
        %373 = vmatpush2.msra.mxu0 0.0
        %374 = vmatprep.subr.mxu0 0.0
        %375 = vmatpush2.msra.mxu0 0.0
        %376 = vmatprep.subr.mxu0 0.0
        %377 = vmatpush2.msra.mxu0 0.0
        %378 = vmatprep.subr.mxu0 0.0
        %379 = vmatpush2.msra.mxu0 0.0
        %380 = vmatprep.subr.mxu0 0.0
        %381 = vmatpush2.msra.mxu0 0.0
        %382 = vmatprep.mubr.f32.mxu0 0.0
        %383 = vmatmul.mubr.f32.gmra.mxu0 %v313
        %v384 = vpop.f32.mrf.mxu0
        %v385 = vadd.f32 %v309, %v384
        %v386 = vpop.f32.mrf.mxu0
        %387 = vmatprep.mubr.f32.mxu0 0.0
        %388 = vmatmul.mubr.f32.gmra.mxu0 %v316
        %v389 = vpop.f32.mrf.mxu0
        %v390 = vadd.f32 %v309, %v389
        %v391 = vpop.f32.mrf.mxu0
        %392 = vdwg.mxu0
        %v393 = vmax.f32 %v385, 0.0
        %v394 = vmax.f32 %v390, 0.0
        %v395 = vld [vmem:[%s3] sm:$0xff]
        %v396 = vld [vmem:[%s3 + $0x8] sm:$0xff]
        %v397 = vld [vmem:[%s3 + $0x10] sm:$0xff]
        %v398 = vld [vmem:[%s3 + $0x18] sm:$0xff]
        %v399 = vld [vmem:[%s4] sm:$0x1]
        %v401 = vlaneseq
        %v402 = vshrl.u32 %v401, 7
        %v403 = vsub.s32 0, %v402
        %v404 = vrot.slane %v399, %v403
        %vm406 = vcmask 261120
        %v408 = vsel %vm406, %v393, 0
        %v411 = vsel %vm406, %v394, 0
        %413 = vmatprep.subr.mxu0 0.0
        %414 = vmatpush1.msra.mxu0 0.0
        %415 = vmatprep.subr.mxu0 0.0
        %416 = vmatpush1.msra.mxu0 0.0
        %417 = vmatprep.subr.mxu0 0.0
        %418 = vmatpush1.msra.mxu0 0.0
        %419 = vmatprep.subr.mxu0 0.0
        %420 = vmatpush1.msra.mxu0 0.0
        %421 = vmatprep.subr.mxu0 0.0
        %422 = vmatpush1.msra.mxu0 0.0
        %423 = vmatprep.subr.mxu0 0.0
        %424 = vmatpush1.msra.mxu0 0.0
        %425 = vmatprep.subr.mxu0 0.0
        %426 = vmatpush1.msra.mxu0 0.0
        %427 = vmatprep.subr.mxu0 0.0
        %428 = vmatpush1.msra.mxu0 0.0
        %429 = vmatprep.subr.mxu0 0.0
        %430 = vmatpush1.msra.mxu0 0.0
        %431 = vmatprep.subr.mxu0 0.0
        %432 = vmatpush1.msra.mxu0 0.0
        %433 = vmatprep.subr.mxu0 0.0
        %434 = vmatpush1.msra.mxu0 0.0
        %435 = vmatprep.subr.mxu0 0.0
        %436 = vmatpush1.msra.mxu0 0.0
        %437 = vmatprep.subr.mxu0 0.0
        %438 = vmatpush1.msra.mxu0 %v398
        %439 = vmatprep.subr.mxu0 0.0
        %440 = vmatpush1.msra.mxu0 %v397
        %441 = vmatprep.subr.mxu0 0.0
        %442 = vmatpush1.msra.mxu0 %v396
        %443 = vmatprep.subr.mxu0 0.0
        %444 = vmatpush1.msra.mxu0 %v395
        %445 = vmatprep.subr.mxu0 0.0
        %446 = vmatpush2.msra.mxu0 0.0
        %447 = vmatprep.subr.mxu0 0.0
        %448 = vmatpush2.msra.mxu0 0.0
        %449 = vmatprep.subr.mxu0 0.0
        %450 = vmatpush2.msra.mxu0 0.0
        %451 = vmatprep.subr.mxu0 0.0
        %452 = vmatpush2.msra.mxu0 0.0
        %453 = vmatprep.subr.mxu0 0.0
        %454 = vmatpush2.msra.mxu0 0.0
        %455 = vmatprep.subr.mxu0 0.0
        %456 = vmatpush2.msra.mxu0 0.0
        %457 = vmatprep.subr.mxu0 0.0
        %458 = vmatpush2.msra.mxu0 0.0
        %459 = vmatprep.subr.mxu0 0.0
        %460 = vmatpush2.msra.mxu0 0.0
        %461 = vmatprep.subr.mxu0 0.0
        %462 = vmatpush2.msra.mxu0 0.0
        %463 = vmatprep.subr.mxu0 0.0
        %464 = vmatpush2.msra.mxu0 0.0
        %465 = vmatprep.subr.mxu0 0.0
        %466 = vmatpush2.msra.mxu0 0.0
        %467 = vmatprep.subr.mxu0 0.0
        %468 = vmatpush2.msra.mxu0 0.0
        %469 = vmatprep.subr.mxu0 0.0
        %470 = vmatpush2.msra.mxu0 0.0
        %471 = vmatprep.subr.mxu0 0.0
        %472 = vmatpush2.msra.mxu0 0.0
        %473 = vmatprep.subr.mxu0 0.0
        %474 = vmatpush2.msra.mxu0 0.0
        %475 = vmatprep.subr.mxu0 0.0
        %476 = vmatpush2.msra.mxu0 0.0
        %477 = vmatprep.mubr.f32.mxu0 0.0
        %478 = vmatmul.mubr.f32.gmra.mxu0 %v408
        %v479 = vpop.f32.mrf.mxu0
        %v480 = vadd.f32 %v404, %v479
        %v481 = vpop.f32.mrf.mxu0
        %482 = vmatprep.mubr.f32.mxu0 0.0
        %483 = vmatmul.mubr.f32.gmra.mxu0 %v411
        %v484 = vpop.f32.mrf.mxu0
        %v485 = vadd.f32 %v404, %v484
        %v486 = vpop.f32.mrf.mxu0
        %487 = vdwg.mxu0
        %v488 = vmax.f32 %v480, 0.0
        %v489 = vmax.f32 %v485, 0.0
        %v490 = vld [vmem:[%s5] sm:$0xff]
        %v491 = vld [vmem:[%s5 + $0x8] sm:$0xff]
        %v492 = vld [vmem:[%s5 + $0x10] sm:$0xff]
        %v493 = vld [vmem:[%s5 + $0x18] sm:$0xff]
        %v494 = vld [vmem:[%s6] sm:$0x1]
        %v496 = vlaneseq
        %v497 = vshrl.u32 %v496, 7
        %v498 = vsub.s32 0, %v497
        %v499 = vrot.slane %v494, %v498
        %v502 = vsel %vm406, %v488, 0
        %v505 = vsel %vm406, %v489, 0
        %507 = vmatprep.subr.mxu0 0.0
        %508 = vmatpush1.msra.mxu0 0.0
        %509 = vmatprep.subr.mxu0 0.0
        %510 = vmatpush1.msra.mxu0 0.0
        %511 = vmatprep.subr.mxu0 0.0
        %512 = vmatpush1.msra.mxu0 0.0
        %513 = vmatprep.subr.mxu0 0.0
        %514 = vmatpush1.msra.mxu0 0.0
        %515 = vmatprep.subr.mxu0 0.0
        %516 = vmatpush1.msra.mxu0 0.0
        %517 = vmatprep.subr.mxu0 0.0
        %518 = vmatpush1.msra.mxu0 0.0
        %519 = vmatprep.subr.mxu0 0.0
        %520 = vmatpush1.msra.mxu0 0.0
        %521 = vmatprep.subr.mxu0 0.0
        %522 = vmatpush1.msra.mxu0 0.0
        %523 = vmatprep.subr.mxu0 0.0
        %524 = vmatpush1.msra.mxu0 0.0
        %525 = vmatprep.subr.mxu0 0.0
        %526 = vmatpush1.msra.mxu0 0.0
        %527 = vmatprep.subr.mxu0 0.0
        %528 = vmatpush1.msra.mxu0 0.0
        %529 = vmatprep.subr.mxu0 0.0
        %530 = vmatpush1.msra.mxu0 0.0
        %531 = vmatprep.subr.mxu0 0.0
        %532 = vmatpush1.msra.mxu0 %v493
        %533 = vmatprep.subr.mxu0 0.0
        %534 = vmatpush1.msra.mxu0 %v492
        %535 = vmatprep.subr.mxu0 0.0
        %536 = vmatpush1.msra.mxu0 %v491
        %537 = vmatprep.subr.mxu0 0.0
        %538 = vmatpush1.msra.mxu0 %v490
        %539 = vmatprep.subr.mxu0 0.0
        %540 = vmatpush2.msra.mxu0 0.0
        %541 = vmatprep.subr.mxu0 0.0
        %542 = vmatpush2.msra.mxu0 0.0
        %543 = vmatprep.subr.mxu0 0.0
        %544 = vmatpush2.msra.mxu0 0.0
        %545 = vmatprep.subr.mxu0 0.0
        %546 = vmatpush2.msra.mxu0 0.0
        %547 = vmatprep.subr.mxu0 0.0
        %548 = vmatpush2.msra.mxu0 0.0
        %549 = vmatprep.subr.mxu0 0.0
        %550 = vmatpush2.msra.mxu0 0.0
        %551 = vmatprep.subr.mxu0 0.0
        %552 = vmatpush2.msra.mxu0 0.0
        %553 = vmatprep.subr.mxu0 0.0
        %554 = vmatpush2.msra.mxu0 0.0
        %555 = vmatprep.subr.mxu0 0.0
        %556 = vmatpush2.msra.mxu0 0.0
        %557 = vmatprep.subr.mxu0 0.0
        %558 = vmatpush2.msra.mxu0 0.0
        %559 = vmatprep.subr.mxu0 0.0
        %560 = vmatpush2.msra.mxu0 0.0
        %561 = vmatprep.subr.mxu0 0.0
        %562 = vmatpush2.msra.mxu0 0.0
        %563 = vmatprep.subr.mxu0 0.0
        %564 = vmatpush2.msra.mxu0 0.0
        %565 = vmatprep.subr.mxu0 0.0
        %566 = vmatpush2.msra.mxu0 0.0
        %567 = vmatprep.subr.mxu0 0.0
        %568 = vmatpush2.msra.mxu0 0.0
        %569 = vmatprep.subr.mxu0 0.0
        %570 = vmatpush2.msra.mxu0 0.0
        %571 = vmatprep.mubr.f32.mxu0 0.0
        %572 = vmatmul.mubr.f32.gmra.mxu0 %v502
        %v573 = vpop.f32.mrf.mxu0
        %v574 = vadd.f32 %v499, %v573
        %v575 = vpop.f32.mrf.mxu0
        %576 = vmatprep.mubr.f32.mxu0 0.0
        %577 = vmatmul.mubr.f32.gmra.mxu0 %v505
        %v578 = vpop.f32.mrf.mxu0
        %v579 = vadd.f32 %v499, %v578
        %v580 = vpop.f32.mrf.mxu0
        %581 = vdwg.mxu0
        %vm582 = vcmask 64512
        %583 = vst.msk [vmem:[%s280] sm:$0xff] %vm582, %v574
        %584 = vst.msk [vmem:[%s280 + $0x8] sm:$0xff] %vm582, %v579
        %s585 = sand.u32 %s178, 1
        %s586 = sand.u32 %s178, 1
        %s587 = smul.addr %s586, 16
        %s588 = scalar_lea.vmem [#allocation2], %s587
        // Predicated region
        $region49: #{tpu_custom_call.1} parent=47 // pred_check
          %p589 = pneg %p188
        $region50: #{tpu_custom_call.1} parent=47 // pred_check_branch
          %591 = sbr.rel (%p589) target = $region52
        $region51: #{tpu_custom_call.1} parent=47 // pred_region
          %s592 = smul.u32 2, %s18
          %s593 = ssub.s32 5, %s592
          %p594 = scmp.lt.s32.totalorder %s593, 2
          %s595 = scalar_select %p594, %s593, 2
          %s596 = smul.u32 128, %s595
          %p597 = scmp.ne.s32.totalorder 0, %s596
          %s598 = smul.addr %s592, 8
          %s599 = scalar_lea.vmem %s7, %s598
          // Predicated region
          $region53: #{tpu_custom_call.1} parent=51 // pred_check
            %p600 = pneg %p597
          $region54: #{tpu_custom_call.1} parent=51 // pred_check_branch
            %602 = sbr.rel (%p600) target = $region56
          $region55: #{tpu_custom_call.1} parent=51 // pred_region
            // Predicated region
            $region57: #{tpu_custom_call.1} parent=55 // pred_check
              _
            $region58: #{tpu_custom_call.1} parent=55 // pred_check_branch
              %604 = sbr.rel (0) target = $region60
            $region59: #{tpu_custom_call.1} parent=55 // pred_region
              // Predicated region
              $region79: #{tpu_custom_call.1} parent=59 // pred_check
                _
              $region80: #{tpu_custom_call.1} parent=59 // pred_check_branch
                %656 = sbr.rel (0) target = $region82
              $region81: #{tpu_custom_call.1} parent=59 // pred_region
                %s657 = sshrl.u32 %s595, 1
                // While loop
                $region83: #{tpu_custom_call.1} parent=81 // loop_pre_header
                  _
                $region84: #{tpu_custom_call.1} parent=81 // loop_header
                  %s659 = sphi 0, %s661
                  %p660 = scmp.ge.s32.totalorder %s659, %s657
                  %s664 = sphi 0, %s673
                  %s665 = sphi %s588, %s676
                  %s666 = sphi %s599, %s677
                $region85: #{tpu_custom_call.1} parent=81 // loop_header_branch
                  %663 = sbr.rel (%p660) target = $region89
                $region86: #{tpu_custom_call.1} parent=81 // loop_body
                  %v667 = vld [vmem:[%s665] sm:$0xff]
                  %668 = vst [vmem:[%s666] sm:$0xff] %v667
                  %v669 = vld [vmem:[%s665 + $0x8] sm:$0xff]
                  %670 = vst [vmem:[%s666 + $0x8] sm:$0xff] %v669
                  %s671 = sadd.s32 1, %s664
                  %p672 = scmp.ge.s32.totalorder %s671, %s657
                  %s673 = scalar_select %p672, 0, %s671
                  %s674 = smul.u32 %s673, 16
                  %s675 = smul.u32 %s673, 16
                  %s676 = scalar_lea.vmem %s588, %s674 [#allocation2]
                  %s677 = scalar_lea.vmem %s599, %s675
                $region87: #{tpu_custom_call.1} parent=81 // loop_footer
                  %s661 = sadd.s32 %s659, 1
                $region88: #{tpu_custom_call.1} parent=81 // loop_footer_branch
                  %658 = sbr.rel target = $region84
                $region89: #{tpu_custom_call.1} parent=81 // loop_exit
                  _
                %s678 = sshrl.u32 %s595, 1
                %s679 = sand.u32 %s595, 1
                %s680 = smul.u32 %s678, 2
                %s681 = smul.u32 8, %s680
                %s682 = scalar_lea.vmem %s588, %s681 [#allocation2]
                %s683 = smul.u32 8, %s680
                %s684 = scalar_lea.vmem %s599, %s683
                // While loop
                $region90: #{tpu_custom_call.1} parent=81 // loop_pre_header
                  _
                $region91: #{tpu_custom_call.1} parent=81 // loop_header
                  %s686 = sphi 0, %s688
                  %p687 = scmp.ge.s32.totalorder %s686, %s679
                  %s691 = sphi 0, %s698
                  %s692 = sphi %s682, %s701
                  %s693 = sphi %s684, %s702
                $region92: #{tpu_custom_call.1} parent=81 // loop_header_branch
                  %690 = sbr.rel (%p687) target = $region96
                $region93: #{tpu_custom_call.1} parent=81 // loop_body
                  %v694 = vld [vmem:[%s692] sm:$0xff]
                  %695 = vst [vmem:[%s693] sm:$0xff] %v694
                  %s696 = sadd.s32 1, %s691
                  %p697 = scmp.ge.s32.totalorder %s696, %s679
                  %s698 = scalar_select %p697, 0, %s696
                  %s699 = smul.u32 %s698, 8
                  %s700 = smul.u32 %s698, 8
                  %s701 = scalar_lea.vmem %s682, %s699 [#allocation2]
                  %s702 = scalar_lea.vmem %s684, %s700
                $region94: #{tpu_custom_call.1} parent=81 // loop_footer
                  %s688 = sadd.s32 %s686, 1
                $region95: #{tpu_custom_call.1} parent=81 // loop_footer_branch
                  %685 = sbr.rel target = $region91
                $region96: #{tpu_custom_call.1} parent=81 // loop_exit
                  _
              $region82: #{tpu_custom_call.1} parent=59 // pred_fallthru
                _
              // Predicated region
              $region97: #{tpu_custom_call.1} parent=59 // pred_check
                _
              $region98: #{tpu_custom_call.1} parent=59 // pred_check_branch
                %704 = sbr.rel target = $region100
              $region99: #{tpu_custom_call.1} parent=59 // pred_region
                _
              $region100: #{tpu_custom_call.1} parent=59 // pred_fallthru
                _
            $region60: #{tpu_custom_call.1} parent=55 // pred_fallthru
              _
            // Predicated region
            $region61: #{tpu_custom_call.1} parent=55 // pred_check
              _
            $region62: #{tpu_custom_call.1} parent=55 // pred_check_branch
              %606 = sbr.rel target = $region64
            $region63: #{tpu_custom_call.1} parent=55 // pred_region
              %s608 = ssub.s32 256, 1
              %s609 = sshrl.u32 %s595, 1
              // While loop
              $region65: #{tpu_custom_call.1} parent=63 // loop_pre_header
                _
              $region66: #{tpu_custom_call.1} parent=63 // loop_header
                %s611 = sphi 0, %s613
                %p612 = scmp.ge.s32.totalorder %s611, %s609
                %s616 = sphi 0, %s625
                %s617 = sphi %s588, %s628
                %s618 = sphi %s599, %s629
              $region67: #{tpu_custom_call.1} parent=63 // loop_header_branch
                %615 = sbr.rel (%p612) target = $region71
              $region68: #{tpu_custom_call.1} parent=63 // loop_body
                %v619 = vld [vmem:[%s617] sm:%s608]
                %620 = vst [vmem:[%s618] sm:%s608] %v619
                %v621 = vld [vmem:[%s617 + $0x8] sm:%s608]
                %622 = vst [vmem:[%s618 + $0x8] sm:%s608] %v621
                %s623 = sadd.s32 1, %s616
                %p624 = scmp.ge.s32.totalorder %s623, %s609
                %s625 = scalar_select %p624, 0, %s623
                %s626 = smul.u32 %s625, 16
                %s627 = smul.u32 %s625, 16
                %s628 = scalar_lea.vmem %s588, %s626 [#allocation2]
                %s629 = scalar_lea.vmem %s599, %s627
              $region69: #{tpu_custom_call.1} parent=63 // loop_footer
                %s613 = sadd.s32 %s611, 1
              $region70: #{tpu_custom_call.1} parent=63 // loop_footer_branch
                %610 = sbr.rel target = $region66
              $region71: #{tpu_custom_call.1} parent=63 // loop_exit
                _
              %s630 = sshrl.u32 %s595, 1
              %s631 = sand.u32 %s595, 1
              %s632 = smul.u32 %s630, 2
              %s633 = smul.u32 8, %s632
              %s634 = scalar_lea.vmem %s588, %s633 [#allocation2]
              %s635 = smul.u32 8, %s632
              %s636 = scalar_lea.vmem %s599, %s635
              // While loop
              $region72: #{tpu_custom_call.1} parent=63 // loop_pre_header
                _
              $region73: #{tpu_custom_call.1} parent=63 // loop_header
                %s638 = sphi 0, %s640
                %p639 = scmp.ge.s32.totalorder %s638, %s631
                %s643 = sphi 0, %s650
                %s644 = sphi %s634, %s653
                %s645 = sphi %s636, %s654
              $region74: #{tpu_custom_call.1} parent=63 // loop_header_branch
                %642 = sbr.rel (%p639) target = $region78
              $region75: #{tpu_custom_call.1} parent=63 // loop_body
                %v646 = vld [vmem:[%s644] sm:%s608]
                %647 = vst [vmem:[%s645] sm:%s608] %v646
                %s648 = sadd.s32 1, %s643
                %p649 = scmp.ge.s32.totalorder %s648, %s631
                %s650 = scalar_select %p649, 0, %s648
                %s651 = smul.u32 %s650, 8
                %s652 = smul.u32 %s650, 8
                %s653 = scalar_lea.vmem %s634, %s651 [#allocation2]
                %s654 = scalar_lea.vmem %s636, %s652
              $region76: #{tpu_custom_call.1} parent=63 // loop_footer
                %s640 = sadd.s32 %s638, 1
              $region77: #{tpu_custom_call.1} parent=63 // loop_footer_branch
                %637 = sbr.rel target = $region73
              $region78: #{tpu_custom_call.1} parent=63 // loop_exit
                _
            $region64: #{tpu_custom_call.1} parent=55 // pred_fallthru
              _
          $region56: #{tpu_custom_call.1} parent=51 // pred_fallthru
            _
          %705 = vnop
        $region52: #{tpu_custom_call.1} parent=47 // pred_fallthru
          _
      $region48: #{tpu_custom_call.1} parent=5 // pred_fallthru
        _
      %p706 = scmp.le.s32.totalorder 2, %s13
      // Predicated region
      $region101: #{tpu_custom_call.1} parent=5 // pred_check
        %p707 = pneg %p706
      $region102: #{tpu_custom_call.1} parent=5 // pred_check_branch
        %709 = sbr.rel (%p707) target = $region104
      $region103: #{tpu_custom_call.1} parent=5 // pred_region
        %s710 = ssub.s32 %s13, 2
        // Predicated region
        $region105: #{tpu_custom_call.1} parent=103 // pred_check
          %p711 = pneg %p194
        $region106: #{tpu_custom_call.1} parent=103 // pred_check_branch
          %713 = sbr.rel (%p711) target = $region108
        $region107: #{tpu_custom_call.1} parent=103 // pred_region
          %s714 = sand.u32 %s179, 1
          %s715 = sand.u32 %s179, 1
          %s716 = smul.addr %s715, 16
          %s717 = scalar_lea.vmem [#allocation2], %s716
        $region108: #{tpu_custom_call.1} parent=103 // pred_fallthru
          _
      $region104: #{tpu_custom_call.1} parent=5 // pred_fallthru
        _
    $region6: #{tpu_custom_call.1} parent=1 // loop_footer
      %s17 = sadd.s32 1, %s13
    $region7: #{tpu_custom_call.1} parent=1 // loop_footer_branch
      %12 = sbr.rel target = $region3
    $region8: #{tpu_custom_call.1} parent=1 // loop_exit
      _

// kernel: tpu_custom_call.1
$region0: #{tpu_custom_call.1}
  #allocation0 [shape = 'u32[]', space=smem, size = 0x4, offset = 0x4, fixed_abs, tag = 'smem constant byte address 0x4 - core index']
  #allocation1 [shape = 'u32[144,128]{1,0:T(1,128)}', space=vmem, size = 0x12000, scoped, tag = 'internal scratch']
  %s0 = inlined_call_operand.vmem [shape: f32[40,16], index: 0, kind: input, shape index: {}]
  %s1 = inlined_call_operand.vmem [shape: f32[16,32], index: 1, kind: input, shape index: {}]
  %s2 = inlined_call_operand.vmem [shape: f32[1,32], index: 2, kind: input, shape index: {}]
  %s3 = inlined_call_operand.vmem [shape: f32[32,32], index: 3, kind: input, shape index: {}]
  %s4 = inlined_call_operand.vmem [shape: f32[1,32], index: 4, kind: input, shape index: {}]
  %s5 = inlined_call_operand.vmem [shape: f32[32,8], index: 5, kind: input, shape index: {}]
  %s6 = inlined_call_operand.vmem [shape: f32[1,8], index: 6, kind: input, shape index: {}]
  %s7 = inlined_call_operand.vmem [shape: f32[40,8], index: 7, kind: output, shape index: {}]
  %s8 = sld [smem:[#allocation0]]
  $region109: #{tpu_custom_call.1} parent=0
    _
  %s10 = ssub.s32 1, %s8
  %s11 = scalar_select 0, %s10, %s8
  $region1: #{tpu_custom_call.1} parent=0
    #allocation2 [shape = 'u8[16384]{0}', space=vmem, size = 0x4000, scoped, tag = 'output window, operand 0']
    loop: start=0, step=1, limit=5
    $region2: #{tpu_custom_call.1} parent=1 // loop_pre_header
      _
    $region3: #{tpu_custom_call.1} parent=1 // loop_header
      %s13 = sphi 0, %s17
      %p14 = scmp.ge.s32.totalorder %s13, 5
      %s23 = sphi 0, %s25
      %s26 = sphi 0, %s23
      %s27 = sphi 0, %s26
      %s43 = sphi 0, %s27
      %s47 = sphi 0, %s47
      %s49 = sphi 0, %s47
      %s50 = sphi 0, %s49
      %s64 = sphi 0, %s50
      %s68 = sphi 0, %s68
      %s70 = sphi 0, %s68
      %s71 = sphi 0, %s70
      %s85 = sphi 0, %s71
      %s89 = sphi 0, %s89
      %s91 = sphi 0, %s89
      %s92 = sphi 0, %s91
      %s106 = sphi 0, %s92
      %s110 = sphi 0, %s110
      %s112 = sphi 0, %s110
      %s113 = sphi 0, %s112
      %s127 = sphi 0, %s113
      %s131 = sphi 0, %s131
      %s133 = sphi 0, %s131
      %s134 = sphi 0, %s133
      %s148 = sphi 0, %s134
      %s152 = sphi 0, %s152
      %s154 = sphi 0, %s152
      %s155 = sphi 0, %s154
      %s169 = sphi 0, %s155
      %s175 = sphi 0, %s177
      %s178 = sphi 0, %s175
      %s179 = sphi 0, %s178
      %s195 = sphi 0, %s179
    $region4: #{tpu_custom_call.1} parent=1 // loop_header_branch
      %16 = sbr.rel (%p14) target = $region8
    $region5: #{tpu_custom_call.1} parent=1 // loop_body
      %s18 = ssub.s32 %s13, 1
      %s19 = ssub.s32 %s13, 2
      %s20 = sadd.s32 %s13, 1
      %s21 = ssub.s32 %s13, %s20
      %p22 = scmp.eq.s32.totalorder %s21, 0
      %s24 = sadd.s32 %s23, 1
      %s25 = scalar_select %p22, %s23, %s24
      %p28 = pneg %p22
      %p29 = scmp.eq.s32.totalorder %s13, 2
      %p30 = por %p28, %p29
      %p31 = scmp.ne.s32.totalorder %s23, %s26
      %p32 = scmp.eq.s32.totalorder %s13, 0
      %p33 = por %p31, %p32
      %p34 = scmp.ne.s32.totalorder %s23, %s26
      %p35 = scmp.eq.s32.totalorder %s18, 2
      %p36 = por %p34, %p35
      %p37 = scmp.ne.s32.totalorder %s26, %s27
      %p38 = scmp.eq.s32.totalorder %s18, 0
      %p39 = por %p37, %p38
      %p40 = scmp.ne.s32.totalorder %s26, %s27
      %p41 = scmp.eq.s32.totalorder %s19, 2
      %p42 = por %p40, %p41
      %p44 = scmp.ne.s32.totalorder %s27, %s43
      %p45 = scmp.eq.s32.totalorder %s19, 0
      %p46 = por %p44, %p45
      %s48 = sadd.s32 %s47, 1
      %p51 = scmp.eq.s32.totalorder %s13, 2
      %p52 = scmp.ne.s32.totalorder %s47, %s49
      %p53 = scmp.eq.s32.totalorder %s13, 0
      %p54 = por %p52, %p53
      %p55 = scmp.ne.s32.totalorder %s47, %s49
      %p56 = scmp.eq.s32.totalorder %s18, 2
      %p57 = por %p55, %p56
      %p58 = scmp.ne.s32.totalorder %s49, %s50
      %p59 = scmp.eq.s32.totalorder %s18, 0
      %p60 = por %p58, %p59
      %p61 = scmp.ne.s32.totalorder %s49, %s50
      %p62 = scmp.eq.s32.totalorder %s19, 2
      %p63 = por %p61, %p62
      %p65 = scmp.ne.s32.totalorder %s50, %s64
      %p66 = scmp.eq.s32.totalorder %s19, 0
      %p67 = por %p65, %p66
      %s69 = sadd.s32 %s68, 1
      %p72 = scmp.eq.s32.totalorder %s13, 2
      %p73 = scmp.ne.s32.totalorder %s68, %s70
      %p74 = scmp.eq.s32.totalorder %s13, 0
      %p75 = por %p73, %p74
      %p76 = scmp.ne.s32.totalorder %s68, %s70
      %p77 = scmp.eq.s32.totalorder %s18, 2
      %p78 = por %p76, %p77
      %p79 = scmp.ne.s32.totalorder %s70, %s71
      %p80 = scmp.eq.s32.totalorder %s18, 0
      %p81 = por %p79, %p80
      %p82 = scmp.ne.s32.totalorder %s70, %s71
      %p83 = scmp.eq.s32.totalorder %s19, 2
      %p84 = por %p82, %p83
      %p86 = scmp.ne.s32.totalorder %s71, %s85
      %p87 = scmp.eq.s32.totalorder %s19, 0
      %p88 = por %p86, %p87
      %s90 = sadd.s32 %s89, 1
      %p93 = scmp.eq.s32.totalorder %s13, 2
      %p94 = scmp.ne.s32.totalorder %s89, %s91
      %p95 = scmp.eq.s32.totalorder %s13, 0
      %p96 = por %p94, %p95
      %p97 = scmp.ne.s32.totalorder %s89, %s91
      %p98 = scmp.eq.s32.totalorder %s18, 2
      %p99 = por %p97, %p98
      %p100 = scmp.ne.s32.totalorder %s91, %s92
      %p101 = scmp.eq.s32.totalorder %s18, 0
      %p102 = por %p100, %p101
      %p103 = scmp.ne.s32.totalorder %s91, %s92
      %p104 = scmp.eq.s32.totalorder %s19, 2
      %p105 = por %p103, %p104
      %p107 = scmp.ne.s32.totalorder %s92, %s106
      %p108 = scmp.eq.s32.totalorder %s19, 0
      %p109 = por %p107, %p108
      %s111 = sadd.s32 %s110, 1
      %p114 = scmp.eq.s32.totalorder %s13, 2
      %p115 = scmp.ne.s32.totalorder %s110, %s112
      %p116 = scmp.eq.s32.totalorder %s13, 0
      %p117 = por %p115, %p116
      %p118 = scmp.ne.s32.totalorder %s110, %s112
      %p119 = scmp.eq.s32.totalorder %s18, 2
      %p120 = por %p118, %p119
      %p121 = scmp.ne.s32.totalorder %s112, %s113
      %p122 = scmp.eq.s32.totalorder %s18, 0
      %p123 = por %p121, %p122
      %p124 = scmp.ne.s32.totalorder %s112, %s113
      %p125 = scmp.eq.s32.totalorder %s19, 2
      %p126 = por %p124, %p125
      %p128 = scmp.ne.s32.totalorder %s113, %s127
      %p129 = scmp.eq.s32.totalorder %s19, 0
      %p130 = por %p128, %p129
      %s132 = sadd.s32 %s131, 1
      %p135 = scmp.eq.s32.totalorder %s13, 2
      %p136 = scmp.ne.s32.totalorder %s131, %s133
      %p137 = scmp.eq.s32.totalorder %s13, 0
      %p138 = por %p136, %p137
      %p139 = scmp.ne.s32.totalorder %s131, %s133
      %p140 = scmp.eq.s32.totalorder %s18, 2
      %p141 = por %p139, %p140
      %p142 = scmp.ne.s32.totalorder %s133, %s134
      %p143 = scmp.eq.s32.totalorder %s18, 0
      %p144 = por %p142, %p143
      %p145 = scmp.ne.s32.totalorder %s133, %s134
      %p146 = scmp.eq.s32.totalorder %s19, 2
      %p147 = por %p145, %p146
      %p149 = scmp.ne.s32.totalorder %s134, %s148
      %p150 = scmp.eq.s32.totalorder %s19, 0
      %p151 = por %p149, %p150
      %s153 = sadd.s32 %s152, 1
      %p156 = scmp.eq.s32.totalorder %s13, 2
      %p157 = scmp.ne.s32.totalorder %s152, %s154
      %p158 = scmp.eq.s32.totalorder %s13, 0
      %p159 = por %p157, %p158
      %p160 = scmp.ne.s32.totalorder %s152, %s154
      %p161 = scmp.eq.s32.totalorder %s18, 2
      %p162 = por %p160, %p161
      %p163 = scmp.ne.s32.totalorder %s154, %s155
      %p164 = scmp.eq.s32.totalorder %s18, 0
      %p165 = por %p163, %p164
      %p166 = scmp.ne.s32.totalorder %s154, %s155
      %p167 = scmp.eq.s32.totalorder %s19, 2
      %p168 = por %p166, %p167
      %p170 = scmp.ne.s32.totalorder %s155, %s169
      %p171 = scmp.eq.s32.totalorder %s19, 0
      %p172 = por %p170, %p171
      %s173 = ssub.s32 %s13, %s20
      %p174 = scmp.eq.s32.totalorder %s173, 0
      %s176 = sadd.s32 %s175, 1
      %s177 = scalar_select %p174, %s175, %s176
      %p180 = pneg %p174
      %p181 = scmp.eq.s32.totalorder %s13, 2
      %p182 = por %p180, %p181
      %p183 = scmp.ne.s32.totalorder %s175, %s178
      %p184 = scmp.eq.s32.totalorder %s13, 0
      %p185 = por %p183, %p184
      %p186 = scmp.ne.s32.totalorder %s175, %s178
      %p187 = scmp.eq.s32.totalorder %s18, 2
      %p188 = por %p186, %p187
      %p189 = scmp.ne.s32.totalorder %s178, %s179
      %p190 = scmp.eq.s32.totalorder %s18, 0
      %p191 = por %p189, %p190
      %p192 = scmp.ne.s32.totalorder %s178, %s179
      %p193 = scmp.eq.s32.totalorder %s19, 2
      %p194 = por %p192, %p193
      %p196 = scmp.ne.s32.totalorder %s179, %s195
      %p197 = scmp.eq.s32.totalorder %s19, 0
      %p198 = por %p196, %p197
      %p199 = scmp.le.s32.totalorder 1, %s13
      %p200 = scmp.lt.s32.totalorder %s13, 4
      %p201 = pnand %p199, %p200
      %p202 = pneg %p201
      // Predicated region
      $region9: #{tpu_custom_call.1} parent=5 // pred_check
        _
      $region10: #{tpu_custom_call.1} parent=5 // pred_check_branch
        %204 = sbr.rel (%p201) target = $region12
      $region11: #{tpu_custom_call.1} parent=5 // pred_region
        %s205 = ssub.s32 %s13, 1
        // Predicated region
        $region13: #{tpu_custom_call.1} parent=11 // pred_check
          %p206 = pneg %p60
        $region14: #{tpu_custom_call.1} parent=11 // pred_check_branch
          %208 = sbr.rel (%p206) target = $region16
        $region15: #{tpu_custom_call.1} parent=11 // pred_region
          _
        $region16: #{tpu_custom_call.1} parent=11 // pred_fallthru
          _
        // Predicated region
        $region17: #{tpu_custom_call.1} parent=11 // pred_check
          %p209 = pneg %p81
        $region18: #{tpu_custom_call.1} parent=11 // pred_check_branch
          %211 = sbr.rel (%p209) target = $region20
        $region19: #{tpu_custom_call.1} parent=11 // pred_region
          _
        $region20: #{tpu_custom_call.1} parent=11 // pred_fallthru
          _
        // Predicated region
        $region21: #{tpu_custom_call.1} parent=11 // pred_check
          %p212 = pneg %p102
        $region22: #{tpu_custom_call.1} parent=11 // pred_check_branch
          %214 = sbr.rel (%p212) target = $region24
        $region23: #{tpu_custom_call.1} parent=11 // pred_region
          _
        $region24: #{tpu_custom_call.1} parent=11 // pred_fallthru
          _
        // Predicated region
        $region25: #{tpu_custom_call.1} parent=11 // pred_check
          %p215 = pneg %p123
        $region26: #{tpu_custom_call.1} parent=11 // pred_check_branch
          %217 = sbr.rel (%p215) target = $region28
        $region27: #{tpu_custom_call.1} parent=11 // pred_region
          _
        $region28: #{tpu_custom_call.1} parent=11 // pred_fallthru
          _
        // Predicated region
        $region29: #{tpu_custom_call.1} parent=11 // pred_check
          %p218 = pneg %p144
        $region30: #{tpu_custom_call.1} parent=11 // pred_check_branch
          %220 = sbr.rel (%p218) target = $region32
        $region31: #{tpu_custom_call.1} parent=11 // pred_region
          _
        $region32: #{tpu_custom_call.1} parent=11 // pred_fallthru
          _
        // Predicated region
        $region33: #{tpu_custom_call.1} parent=11 // pred_check
          %p221 = pneg %p165
        $region34: #{tpu_custom_call.1} parent=11 // pred_check_branch
          %223 = sbr.rel (%p221) target = $region36
        $region35: #{tpu_custom_call.1} parent=11 // pred_region
          _
        $region36: #{tpu_custom_call.1} parent=11 // pred_fallthru
          _
      $region12: #{tpu_custom_call.1} parent=5 // pred_fallthru
        _
      %p224 = scmp.lt.s32.totalorder %s13, 3
      // Predicated region
      $region37: #{tpu_custom_call.1} parent=5 // pred_check
        %p225 = pneg %p224
      $region38: #{tpu_custom_call.1} parent=5 // pred_check_branch
        %227 = sbr.rel (%p225) target = $region40
      $region39: #{tpu_custom_call.1} parent=5 // pred_region
        // Predicated region
        $region41: #{tpu_custom_call.1} parent=39 // pred_check
          %p228 = pneg %p33
        $region42: #{tpu_custom_call.1} parent=39 // pred_check_branch
          %230 = sbr.rel (%p228) target = $region44
        $region43: #{tpu_custom_call.1} parent=39 // pred_region
          %s231 = smul.u32 2, %s13
          %s232 = ssub.s32 5, %s231
          %p233 = scmp.lt.s32.totalorder %s232, 2
          %s234 = scalar_select %p233, %s232, 2
          %s235 = smul.u32 128, %s234
          %p236 = scmp.lt.s32.totalorder %s231, 4
          %s237 = scalar_select %p236, %s231, 4
          %s238 = smul.addr %s237, 8
          %s239 = scalar_lea.vmem %s0, %s238
          %s240 = smul.u32 2, %s13
          %s241 = ssub.s32 5, %s240
          %p242 = scmp.lt.s32.totalorder %s241, 2
          %s243 = scalar_select %p242, %s241, 2
          %s244 = smul.u32 128, %s243
        $region44: #{tpu_custom_call.1} parent=39 // pred_fallthru
          _
      $region40: #{tpu_custom_call.1} parent=5 // pred_fallthru
        _
      %p245 = scmp.le.s32.totalorder 1, %s13
      %p246 = scmp.lt.s32.totalorder %s13, 4
      %p247 = pnand %p245, %p246
      %p248 = pneg %p247
      // Predicated region
      $region45: #{tpu_custom_call.1} parent=5 // pred_check
        _
      $region46: #{tpu_custom_call.1} parent=5 // pred_check_branch
        %250 = sbr.rel (%p247) target = $region48
      $region47: #{tpu_custom_call.1} parent=5 // pred_region
        %s251 = ssub.s32 %s13, 1
        %s252 = smul.u32 2, %s18
        %s253 = ssub.s32 5, %s252
        %p254 = scmp.lt.s32.totalorder %s253, 2
        %s255 = scalar_select %p254, %s253, 2
        %s256 = smul.u32 128, %s255
        %p257 = scmp.lt.s32.totalorder %s252, 4
        %s258 = scalar_select %p257, %s252, 4
        %s259 = smul.addr %s258, 8
        %s260 = scalar_lea.vmem %s0, %s259
        %p261 = pneg %p39
        %p262 = pneg %p36
        %p263 = pneg %p60
        %p264 = pneg %p57
        %p265 = pneg %p81
        %p266 = pneg %p78
        %p267 = pneg %p102
        %p268 = pneg %p99
        %p269 = pneg %p123
        %p270 = pneg %p120
        %p271 = pneg %p144
        %p272 = pneg %p141
        %p273 = pneg %p165
        %p274 = pneg %p162
        %p275 = pneg %p191
        %p276 = pneg %p188
        %s277 = sand.u32 %s178, 1
        %s278 = sand.u32 %s178, 1
        %s279 = smul.addr %s278, 16
        %s280 = scalar_lea.vmem [#allocation2], %s279
        %s281 = smul.u32 2, %s18
        %s282 = ssub.s32 5, %s281
        %p283 = scmp.lt.s32.totalorder %s282, 2
        %s284 = scalar_select %p283, %s282, 2
        %s285 = smul.u32 128, %s284
        %p286 = scmp.lt.s32.totalorder %s281, 4
        %s287 = scalar_select %p286, %s281, 4
        %s288 = smul.addr %s287, 8
        %s289 = scalar_lea.vmem %s0, %s288
        %s290 = smul.u32 2, %s18
        %s291 = ssub.s32 5, %s290
        %p292 = scmp.lt.s32.totalorder %s291, 2
        %s293 = scalar_select %p292, %s291, 2
        %s294 = smul.u32 128, %s293
        %s295 = smul.u32 2, %s18
        %s296 = ssub.s32 5, %s295
        %p297 = scmp.lt.s32.totalorder %s296, 2
        %s298 = scalar_select %p297, %s296, 2
        %s299 = smul.u32 128, %s298
        %v300 = vld [vmem:[%s289] sm:$0xff]
        %v301 = vld [vmem:[%s289 + $0x8] sm:$0xff]
        %v302 = vld [vmem:[%s1] sm:$0xff]
        %v303 = vld [vmem:[%s1 + $0x8] sm:$0xff]
        %v304 = vld [vmem:[%s2] sm:$0x1]
        %v306 = vlaneseq
        %v307 = vshrl.u32 %v306, 7
        %v308 = vsub.s32 0, %v307
        %v309 = vrot.slane %v304, %v308
        %vm311 = vcmask 130048
        %v313 = vsel %vm311, %v300, 0
        %v316 = vsel %vm311, %v301, 0
        %318 = vmatprep.subr.mxu0 0.0
        %319 = vmatpush1.msra.mxu0 0.0
        %320 = vmatprep.subr.mxu0 0.0
        %321 = vmatpush1.msra.mxu0 0.0
        %322 = vmatprep.subr.mxu0 0.0
        %323 = vmatpush1.msra.mxu0 0.0
        %324 = vmatprep.subr.mxu0 0.0
        %325 = vmatpush1.msra.mxu0 0.0
        %326 = vmatprep.subr.mxu0 0.0
        %327 = vmatpush1.msra.mxu0 0.0
        %328 = vmatprep.subr.mxu0 0.0
        %329 = vmatpush1.msra.mxu0 0.0
        %330 = vmatprep.subr.mxu0 0.0
        %331 = vmatpush1.msra.mxu0 0.0
        %332 = vmatprep.subr.mxu0 0.0
        %333 = vmatpush1.msra.mxu0 0.0
        %334 = vmatprep.subr.mxu0 0.0
        %335 = vmatpush1.msra.mxu0 0.0
        %336 = vmatprep.subr.mxu0 0.0
        %337 = vmatpush1.msra.mxu0 0.0
        %338 = vmatprep.subr.mxu0 0.0
        %339 = vmatpush1.msra.mxu0 0.0
        %340 = vmatprep.subr.mxu0 0.0
        %341 = vmatpush1.msra.mxu0 0.0
        %342 = vmatprep.subr.mxu0 0.0
        %343 = vmatpush1.msra.mxu0 0.0
        %344 = vmatprep.subr.mxu0 0.0
        %345 = vmatpush1.msra.mxu0 0.0
        %346 = vmatprep.subr.mxu0 0.0
        %347 = vmatpush1.msra.mxu0 %v303
        %348 = vmatprep.subr.mxu0 0.0
        %349 = vmatpush1.msra.mxu0 %v302
        %350 = vmatprep.subr.mxu0 0.0
        %351 = vmatpush2.msra.mxu0 0.0
        %352 = vmatprep.subr.mxu0 0.0
        %353 = vmatpush2.msra.mxu0 0.0
        %354 = vmatprep.subr.mxu0 0.0
        %355 = vmatpush2.msra.mxu0 0.0
        %356 = vmatprep.subr.mxu0 0.0
        %357 = vmatpush2.msra.mxu0 0.0
        %358 = vmatprep.subr.mxu0 0.0
        %359 = vmatpush2.msra.mxu0 0.0
        %360 = vmatprep.subr.mxu0 0.0
        %361 = vmatpush2.msra.mxu0 0.0
        %362 = vmatprep.subr.mxu0 0.0
        %363 = vmatpush2.msra.mxu0 0.0
        %364 = vmatprep.subr.mxu0 0.0
        %365 = vmatpush2.msra.mxu0 0.0
        %366 = vmatprep.subr.mxu0 0.0
        %367 = vmatpush2.msra.mxu0 0.0
        %368 = vmatprep.subr.mxu0 0.0
        %369 = vmatpush2.msra.mxu0 0.0
        %370 = vmatprep.subr.mxu0 0.0
        %371 = vmatpush2.msra.mxu0 0.0
        %372 = vmatprep.subr.mxu0 0.0
        %373 = vmatpush2.msra.mxu0 0.0
        %374 = vmatprep.subr.mxu0 0.0
        %375 = vmatpush2.msra.mxu0 0.0
        %376 = vmatprep.subr.mxu0 0.0
        %377 = vmatpush2.msra.mxu0 0.0
        %378 = vmatprep.subr.mxu0 0.0
        %379 = vmatpush2.msra.mxu0 0.0
        %380 = vmatprep.subr.mxu0 0.0
        %381 = vmatpush2.msra.mxu0 0.0
        %382 = vmatprep.mubr.f32.mxu0 0.0
        %383 = vmatmul.mubr.f32.gmra.mxu0 %v313
        %v384 = vpop.f32.mrf.mxu0
        %v385 = vadd.f32 %v309, %v384
        %v386 = vpop.f32.mrf.mxu0
        %387 = vmatprep.mubr.f32.mxu0 0.0
        %388 = vmatmul.mubr.f32.gmra.mxu0 %v316
        %v389 = vpop.f32.mrf.mxu0
        %v390 = vadd.f32 %v309, %v389
        %v391 = vpop.f32.mrf.mxu0
        %392 = vdwg.mxu0
        %v393 = vmax.f32 %v385, 0.0
        %v394 = vmax.f32 %v390, 0.0
        %v395 = vld [vmem:[%s3] sm:$0xff]
        %v396 = vld [vmem:[%s3 + $0x8] sm:$0xff]
        %v397 = vld [vmem:[%s3 + $0x10] sm:$0xff]
        %v398 = vld [vmem:[%s3 + $0x18] sm:$0xff]
        %v399 = vld [vmem:[%s4] sm:$0x1]
        %v401 = vlaneseq
        %v402 = vshrl.u32 %v401, 7
        %v403 = vsub.s32 0, %v402
        %v404 = vrot.slane %v399, %v403
        %vm406 = vcmask 261120
        %v408 = vsel %vm406, %v393, 0
        %v411 = vsel %vm406, %v394, 0
        %413 = vmatprep.subr.mxu0 0.0
        %414 = vmatpush1.msra.mxu0 0.0
        %415 = vmatprep.subr.mxu0 0.0
        %416 = vmatpush1.msra.mxu0 0.0
        %417 = vmatprep.subr.mxu0 0.0
        %418 = vmatpush1.msra.mxu0 0.0
        %419 = vmatprep.subr.mxu0 0.0
        %420 = vmatpush1.msra.mxu0 0.0
        %421 = vmatprep.subr.mxu0 0.0
        %422 = vmatpush1.msra.mxu0 0.0
        %423 = vmatprep.subr.mxu0 0.0
        %424 = vmatpush1.msra.mxu0 0.0
        %425 = vmatprep.subr.mxu0 0.0
        %426 = vmatpush1.msra.mxu0 0.0
        %427 = vmatprep.subr.mxu0 0.0
        %428 = vmatpush1.msra.mxu0 0.0
        %429 = vmatprep.subr.mxu0 0.0
        %430 = vmatpush1.msra.mxu0 0.0
        %431 = vmatprep.subr.mxu0 0.0
        %432 = vmatpush1.msra.mxu0 0.0
        %433 = vmatprep.subr.mxu0 0.0
        %434 = vmatpush1.msra.mxu0 0.0
        %435 = vmatprep.subr.mxu0 0.0
        %436 = vmatpush1.msra.mxu0 0.0
        %437 = vmatprep.subr.mxu0 0.0
        %438 = vmatpush1.msra.mxu0 %v398
        %439 = vmatprep.subr.mxu0 0.0
        %440 = vmatpush1.msra.mxu0 %v397
        %441 = vmatprep.subr.mxu0 0.0
        %442 = vmatpush1.msra.mxu0 %v396
        %443 = vmatprep.subr.mxu0 0.0
        %444 = vmatpush1.msra.mxu0 %v395
        %445 = vmatprep.subr.mxu0 0.0
        %446 = vmatpush2.msra.mxu0 0.0
        %447 = vmatprep.subr.mxu0 0.0
        %448 = vmatpush2.msra.mxu0 0.0
        %449 = vmatprep.subr.mxu0 0.0
        %450 = vmatpush2.msra.mxu0 0.0
        %451 = vmatprep.subr.mxu0 0.0
        %452 = vmatpush2.msra.mxu0 0.0
        %453 = vmatprep.subr.mxu0 0.0
        %454 = vmatpush2.msra.mxu0 0.0
        %455 = vmatprep.subr.mxu0 0.0
        %456 = vmatpush2.msra.mxu0 0.0
        %457 = vmatprep.subr.mxu0 0.0
        %458 = vmatpush2.msra.mxu0 0.0
        %459 = vmatprep.subr.mxu0 0.0
        %460 = vmatpush2.msra.mxu0 0.0
        %461 = vmatprep.subr.mxu0 0.0
        %462 = vmatpush2.msra.mxu0 0.0
        %463 = vmatprep.subr.mxu0 0.0
        %464 = vmatpush2.msra.mxu0 0.0
        %465 = vmatprep.subr.mxu0 0.0
        %466 = vmatpush2.msra.mxu0 0.0
        %467 = vmatprep.subr.mxu0 0.0
        %468 = vmatpush2.msra.mxu0 0.0
        %469 = vmatprep.subr.mxu0 0.0
        %470 = vmatpush2.msra.mxu0 0.0
        %471 = vmatprep.subr.mxu0 0.0
        %472 = vmatpush2.msra.mxu0 0.0
        %473 = vmatprep.subr.mxu0 0.0
        %474 = vmatpush2.msra.mxu0 0.0
        %475 = vmatprep.subr.mxu0 0.0
        %476 = vmatpush2.msra.mxu0 0.0
        %477 = vmatprep.mubr.f32.mxu0 0.0
        %478 = vmatmul.mubr.f32.gmra.mxu0 %v408
        %v479 = vpop.f32.mrf.mxu0
        %v480 = vadd.f32 %v404, %v479
        %v481 = vpop.f32.mrf.mxu0
        %482 = vmatprep.mubr.f32.mxu0 0.0
        %483 = vmatmul.mubr.f32.gmra.mxu0 %v411
        %v484 = vpop.f32.mrf.mxu0
        %v485 = vadd.f32 %v404, %v484
        %v486 = vpop.f32.mrf.mxu0
        %487 = vdwg.mxu0
        %v488 = vmax.f32 %v480, 0.0
        %v489 = vmax.f32 %v485, 0.0
        %v490 = vld [vmem:[%s5] sm:$0xff]
        %v491 = vld [vmem:[%s5 + $0x8] sm:$0xff]
        %v492 = vld [vmem:[%s5 + $0x10] sm:$0xff]
        %v493 = vld [vmem:[%s5 + $0x18] sm:$0xff]
        %v494 = vld [vmem:[%s6] sm:$0x1]
        %v496 = vlaneseq
        %v497 = vshrl.u32 %v496, 7
        %v498 = vsub.s32 0, %v497
        %v499 = vrot.slane %v494, %v498
        %v502 = vsel %vm406, %v488, 0
        %v505 = vsel %vm406, %v489, 0
        %507 = vmatprep.subr.mxu0 0.0
        %508 = vmatpush1.msra.mxu0 0.0
        %509 = vmatprep.subr.mxu0 0.0
        %510 = vmatpush1.msra.mxu0 0.0
        %511 = vmatprep.subr.mxu0 0.0
        %512 = vmatpush1.msra.mxu0 0.0
        %513 = vmatprep.subr.mxu0 0.0
        %514 = vmatpush1.msra.mxu0 0.0
        %515 = vmatprep.subr.mxu0 0.0
        %516 = vmatpush1.msra.mxu0 0.0
        %517 = vmatprep.subr.mxu0 0.0
        %518 = vmatpush1.msra.mxu0 0.0
        %519 = vmatprep.subr.mxu0 0.0
        %520 = vmatpush1.msra.mxu0 0.0
        %521 = vmatprep.subr.mxu0 0.0
        %522 = vmatpush1.msra.mxu0 0.0
        %523 = vmatprep.subr.mxu0 0.0
        %524 = vmatpush1.msra.mxu0 0.0
        %525 = vmatprep.subr.mxu0 0.0
        %526 = vmatpush1.msra.mxu0 0.0
        %527 = vmatprep.subr.mxu0 0.0
        %528 = vmatpush1.msra.mxu0 0.0
        %529 = vmatprep.subr.mxu0 0.0
        %530 = vmatpush1.msra.mxu0 0.0
        %531 = vmatprep.subr.mxu0 0.0
        %532 = vmatpush1.msra.mxu0 %v493
        %533 = vmatprep.subr.mxu0 0.0
        %534 = vmatpush1.msra.mxu0 %v492
        %535 = vmatprep.subr.mxu0 0.0
        %536 = vmatpush1.msra.mxu0 %v491
        %537 = vmatprep.subr.mxu0 0.0
        %538 = vmatpush1.msra.mxu0 %v490
        %539 = vmatprep.subr.mxu0 0.0
        %540 = vmatpush2.msra.mxu0 0.0
        %541 = vmatprep.subr.mxu0 0.0
        %542 = vmatpush2.msra.mxu0 0.0
        %543 = vmatprep.subr.mxu0 0.0
        %544 = vmatpush2.msra.mxu0 0.0
        %545 = vmatprep.subr.mxu0 0.0
        %546 = vmatpush2.msra.mxu0 0.0
        %547 = vmatprep.subr.mxu0 0.0
        %548 = vmatpush2.msra.mxu0 0.0
        %549 = vmatprep.subr.mxu0 0.0
        %550 = vmatpush2.msra.mxu0 0.0
        %551 = vmatprep.subr.mxu0 0.0
        %552 = vmatpush2.msra.mxu0 0.0
        %553 = vmatprep.subr.mxu0 0.0
        %554 = vmatpush2.msra.mxu0 0.0
        %555 = vmatprep.subr.mxu0 0.0
        %556 = vmatpush2.msra.mxu0 0.0
        %557 = vmatprep.subr.mxu0 0.0
        %558 = vmatpush2.msra.mxu0 0.0
        %559 = vmatprep.subr.mxu0 0.0
        %560 = vmatpush2.msra.mxu0 0.0
        %561 = vmatprep.subr.mxu0 0.0
        %562 = vmatpush2.msra.mxu0 0.0
        %563 = vmatprep.subr.mxu0 0.0
        %564 = vmatpush2.msra.mxu0 0.0
        %565 = vmatprep.subr.mxu0 0.0
        %566 = vmatpush2.msra.mxu0 0.0
        %567 = vmatprep.subr.mxu0 0.0
        %568 = vmatpush2.msra.mxu0 0.0
        %569 = vmatprep.subr.mxu0 0.0
        %570 = vmatpush2.msra.mxu0 0.0
        %571 = vmatprep.mubr.f32.mxu0 0.0
        %572 = vmatmul.mubr.f32.gmra.mxu0 %v502
        %v573 = vpop.f32.mrf.mxu0
        %v574 = vadd.f32 %v499, %v573
        %v575 = vpop.f32.mrf.mxu0
        %576 = vmatprep.mubr.f32.mxu0 0.0
        %577 = vmatmul.mubr.f32.gmra.mxu0 %v505
        %v578 = vpop.f32.mrf.mxu0
        %v579 = vadd.f32 %v499, %v578
        %v580 = vpop.f32.mrf.mxu0
        %581 = vdwg.mxu0
        %vm582 = vcmask 64512
        %583 = vst.msk [vmem:[%s280] sm:$0xff] %vm582, %v574
        %584 = vst.msk [vmem:[%s280 + $0x8] sm:$0xff] %vm582, %v579
        %s585 = sand.u32 %s178, 1
        %s586 = sand.u32 %s178, 1
        %s587 = smul.addr %s586, 16
        %s588 = scalar_lea.vmem [#allocation2], %s587
        // Predicated region
        $region49: #{tpu_custom_call.1} parent=47 // pred_check
          %p589 = pneg %p188
        $region50: #{tpu_custom_call.1} parent=47 // pred_check_branch
          %591 = sbr.rel (%p589) target = $region52
        $region51: #{tpu_custom_call.1} parent=47 // pred_region
          %s592 = smul.u32 2, %s18
          %s593 = ssub.s32 5, %s592
          %p594 = scmp.lt.s32.totalorder %s593, 2
          %s595 = scalar_select %p594, %s593, 2
          %s596 = smul.u32 128, %s595
          %p597 = scmp.ne.s32.totalorder 0, %s596
          %s598 = smul.addr %s592, 8
          %s599 = scalar_lea.vmem %s7, %s598
          // Predicated region
          $region53: #{tpu_custom_call.1} parent=51 // pred_check
            %p600 = pneg %p597
          $region54: #{tpu_custom_call.1} parent=51 // pred_check_branch
            %602 = sbr.rel (%p600) target = $region56
          $region55: #{tpu_custom_call.1} parent=51 // pred_region
            // Predicated region
            $region57: #{tpu_custom_call.1} parent=55 // pred_check
              _
            $region58: #{tpu_custom_call.1} parent=55 // pred_check_branch
              %604 = sbr.rel (0) target = $region60
            $region59: #{tpu_custom_call.1} parent=55 // pred_region
              // Predicated region
              $region79: #{tpu_custom_call.1} parent=59 // pred_check
                _
              $region80: #{tpu_custom_call.1} parent=59 // pred_check_branch
                %656 = sbr.rel (0) target = $region82
              $region81: #{tpu_custom_call.1} parent=59 // pred_region
                %s657 = sshrl.u32 %s595, 1
                // While loop
                $region83: #{tpu_custom_call.1} parent=81 // loop_pre_header
                  _
                $region84: #{tpu_custom_call.1} parent=81 // loop_header
                  %s659 = sphi 0, %s661
                  %p660 = scmp.ge.s32.totalorder %s659, %s657
                  %s664 = sphi 0, %s673
                  %s665 = sphi %s588, %s676
                  %s666 = sphi %s599, %s677
                $region85: #{tpu_custom_call.1} parent=81 // loop_header_branch
                  %663 = sbr.rel (%p660) target = $region89
                $region86: #{tpu_custom_call.1} parent=81 // loop_body
                  %v667 = vld [vmem:[%s665] sm:$0xff]
                  %668 = vst [vmem:[%s666] sm:$0xff] %v667
                  %v669 = vld [vmem:[%s665 + $0x8] sm:$0xff]
                  %670 = vst [vmem:[%s666 + $0x8] sm:$0xff] %v669
                  %s671 = sadd.s32 1, %s664
                  %p672 = scmp.ge.s32.totalorder %s671, %s657
                  %s673 = scalar_select %p672, 0, %s671
                  %s674 = smul.u32 %s673, 16
                  %s675 = smul.u32 %s673, 16
                  %s676 = scalar_lea.vmem %s588, %s674 [#allocation2]
                  %s677 = scalar_lea.vmem %s599, %s675
                $region87: #{tpu_custom_call.1} parent=81 // loop_footer
                  %s661 = sadd.s32 %s659, 1
                $region88: #{tpu_custom_call.1} parent=81 // loop_footer_branch
                  %658 = sbr.rel target = $region84
                $region89: #{tpu_custom_call.1} parent=81 // loop_exit
                  _
                %s678 = sshrl.u32 %s595, 1
                %s679 = sand.u32 %s595, 1
                %s680 = smul.u32 %s678, 2
                %s681 = smul.u32 8, %s680
                %s682 = scalar_lea.vmem %s588, %s681 [#allocation2]
                %s683 = smul.u32 8, %s680
                %s684 = scalar_lea.vmem %s599, %s683
                // While loop
                $region90: #{tpu_custom_call.1} parent=81 // loop_pre_header
                  _
                $region91: #{tpu_custom_call.1} parent=81 // loop_header
                  %s686 = sphi 0, %s688
                  %p687 = scmp.ge.s32.totalorder %s686, %s679
                  %s691 = sphi 0, %s698
                  %s692 = sphi %s682, %s701
                  %s693 = sphi %s684, %s702
                $region92: #{tpu_custom_call.1} parent=81 // loop_header_branch
                  %690 = sbr.rel (%p687) target = $region96
                $region93: #{tpu_custom_call.1} parent=81 // loop_body
                  %v694 = vld [vmem:[%s692] sm:$0xff]
                  %695 = vst [vmem:[%s693] sm:$0xff] %v694
                  %s696 = sadd.s32 1, %s691
                  %p697 = scmp.ge.s32.totalorder %s696, %s679
                  %s698 = scalar_select %p697, 0, %s696
                  %s699 = smul.u32 %s698, 8
                  %s700 = smul.u32 %s698, 8
                  %s701 = scalar_lea.vmem %s682, %s699 [#allocation2]
                  %s702 = scalar_lea.vmem %s684, %s700
                $region94: #{tpu_custom_call.1} parent=81 // loop_footer
                  %s688 = sadd.s32 %s686, 1
                $region95: #{tpu_custom_call.1} parent=81 // loop_footer_branch
                  %685 = sbr.rel target = $region91
                $region96: #{tpu_custom_call.1} parent=81 // loop_exit
                  _
              $region82: #{tpu_custom_call.1} parent=59 // pred_fallthru
                _
              // Predicated region
              $region97: #{tpu_custom_call.1} parent=59 // pred_check
                _
              $region98: #{tpu_custom_call.1} parent=59 // pred_check_branch
                %704 = sbr.rel target = $region100
              $region99: #{tpu_custom_call.1} parent=59 // pred_region
                _
              $region100: #{tpu_custom_call.1} parent=59 // pred_fallthru
                _
            $region60: #{tpu_custom_call.1} parent=55 // pred_fallthru
              _
            // Predicated region
            $region61: #{tpu_custom_call.1} parent=55 // pred_check
              _
            $region62: #{tpu_custom_call.1} parent=55 // pred_check_branch
              %606 = sbr.rel target = $region64
            $region63: #{tpu_custom_call.1} parent=55 // pred_region
              %s608 = ssub.s32 256, 1
              %s609 = sshrl.u32 %s595, 1
              // While loop
              $region65: #{tpu_custom_call.1} parent=63 // loop_pre_header
                _
              $region66: #{tpu_custom_call.1} parent=63 // loop_header
                %s611 = sphi 0, %s613
                %p612 = scmp.ge.s32.totalorder %s611, %s609
                %s616 = sphi 0, %s625
                %s617 = sphi %s588, %s628
                %s618 = sphi %s599, %s629
              $region67: #{tpu_custom_call.1} parent=63 // loop_header_branch
                %615 = sbr.rel (%p612) target = $region71
              $region68: #{tpu_custom_call.1} parent=63 // loop_body
                %v619 = vld [vmem:[%s617] sm:%s608]
                %620 = vst [vmem:[%s618] sm:%s608] %v619
                %v621 = vld [vmem:[%s617 + $0x8] sm:%s608]
                %622 = vst [vmem:[%s618 + $0x8] sm:%s608] %v621
                %s623 = sadd.s32 1, %s616
                %p624 = scmp.ge.s32.totalorder %s623, %s609
                %s625 = scalar_select %p624, 0, %s623
                %s626 = smul.u32 %s625, 16
                %s627 = smul.u32 %s625, 16
                %s628 = scalar_lea.vmem %s588, %s626 [#allocation2]
                %s629 = scalar_lea.vmem %s599, %s627
              $region69: #{tpu_custom_call.1} parent=63 // loop_footer
                %s613 = sadd.s32 %s611, 1
              $region70: #{tpu_custom_call.1} parent=63 // loop_footer_branch
                %610 = sbr.rel target = $region66
              $region71: #{tpu_custom_call.1} parent=63 // loop_exit
                _
              %s630 = sshrl.u32 %s595, 1
              %s631 = sand.u32 %s595, 1
              %s632 = smul.u32 %s630, 2
              %s633 = smul.u32 8, %s632
              %s634 = scalar_lea.vmem %s588, %s633 [#allocation2]
              %s635 = smul.u32 8, %s632
              %s636 = scalar_lea.vmem %s599, %s635
              // While loop
              $region72: #{tpu_custom_call.1} parent=63 // loop_pre_header
                _
              $region73: #{tpu_custom_call.1} parent=63 // loop_header
                %s638 = sphi 0, %s640
                %p639 = scmp.ge.s32.totalorder %s638, %s631
                %s643 = sphi 0, %s650
                %s644 = sphi %s634, %s653
                %s645 = sphi %s636, %s654
              $region74: #{tpu_custom_call.1} parent=63 // loop_header_branch
                %642 = sbr.rel (%p639) target = $region78
              $region75: #{tpu_custom_call.1} parent=63 // loop_body
                %v646 = vld [vmem:[%s644] sm:%s608]
                %647 = vst [vmem:[%s645] sm:%s608] %v646
                %s648 = sadd.s32 1, %s643
                %p649 = scmp.ge.s32.totalorder %s648, %s631
                %s650 = scalar_select %p649, 0, %s648
                %s651 = smul.u32 %s650, 8
                %s652 = smul.u32 %s650, 8
                %s653 = scalar_lea.vmem %s634, %s651 [#allocation2]
                %s654 = scalar_lea.vmem %s636, %s652
              $region76: #{tpu_custom_call.1} parent=63 // loop_footer
                %s640 = sadd.s32 %s638, 1
              $region77: #{tpu_custom_call.1} parent=63 // loop_footer_branch
                %637 = sbr.rel target = $region73
              $region78: #{tpu_custom_call.1} parent=63 // loop_exit
                _
            $region64: #{tpu_custom_call.1} parent=55 // pred_fallthru
              _
          $region56: #{tpu_custom_call.1} parent=51 // pred_fallthru
            _
          %705 = vnop
        $region52: #{tpu_custom_call.1} parent=47 // pred_fallthru
          _
      $region48: #{tpu_custom_call.1} parent=5 // pred_fallthru
        _
      %p706 = scmp.le.s32.totalorder 2, %s13
      // Predicated region
      $region101: #{tpu_custom_call.1} parent=5 // pred_check
        %p707 = pneg %p706
      $region102: #{tpu_custom_call.1} parent=5 // pred_check_branch
        %709 = sbr.rel (%p707) target = $region104
      $region103: #{tpu_custom_call.1} parent=5 // pred_region
        %s710 = ssub.s32 %s13, 2
        // Predicated region
        $region105: #{tpu_custom_call.1} parent=103 // pred_check
          %p711 = pneg %p194
        $region106: #{tpu_custom_call.1} parent=103 // pred_check_branch
          %713 = sbr.rel (%p711) target = $region108
        $region107: #{tpu_custom_call.1} parent=103 // pred_region
          %s714 = sand.u32 %s179, 1
          %s715 = sand.u32 %s179, 1
          %s716 = smul.addr %s715, 16
          %s717 = scalar_lea.vmem [#allocation2], %s716
        $region108: #{tpu_custom_call.1} parent=103 // pred_fallthru
          _
      $region104: #{tpu_custom_call.1} parent=5 // pred_fallthru
        _
    $region6: #{tpu_custom_call.1} parent=1 // loop_footer
      %s17 = sadd.s32 1, %s13
    $region7: #{tpu_custom_call.1} parent=1 // loop_footer_branch
      %12 = sbr.rel target = $region3
    $region8: #{tpu_custom_call.1} parent=1 // loop_exit
      _

</llo_original>
